<compile_context>
chip_gen: v5e
topology: v5e:2x2
jax: 0.10.0
libtpu: 0.0.40
codegen_flags: <defaults>
</compile_context>

<pallas_src>
import jax
import jax.numpy as jnp
from jax.experimental import pallas as pl
from jax.experimental.pallas import tpu as pltpu


def _round_up(v, m):
    return (v + m - 1) // m * m


# ---------------------------------------------------------------------------
# Fused kernel: conv1(3x3,p=1)+bias+ReLU -> conv2(3x3,p=1)+bias+ReLU -> BN stats
# One grid step per batch image.  All conv taps are static lane-shifted slices
# of the padded-flat image ("flat shift" trick: output column j in [W, W+2) is
# garbage and gets masked), so no im2col leaves VMEM.
# ---------------------------------------------------------------------------
def _make_resblock_kernel(Wp, L):
    shifts = tuple(di * Wp + dj for di in range(3) for dj in range(3))

    def kernel(x_ref, w1_ref, b1_ref, w2_ref, b2_ref, m_ref,
               y_ref, s1_ref, s2_ref, y1_scr):
        # x_ref : (1, Cin_p, Lp) bf16  zero-padded flat image
        # w*_ref: (9, Co_p, Ci_p) bf16 per-tap weight matrices (resident)
        # b*_ref: (Co_p, 1)      f32
        # m_ref : (1, L)         f32   1.0 = valid output column, 0.0 = garbage
        # y_ref : (1, Cout_p, L) bf16  conv2 output (garbage columns zeroed)
        # s1/s2 : (1, Cout_p, 1) f32   per-image per-channel sum / sum-of-squares
        # y1_scr: (Cmid_p, Lp)   bf16  padded-flat conv1 output (VMEM only)
        mask = m_ref[...]

        # ---- conv1 + bias + ReLU : 9 accumulating bf16 MXU matmuls ----------
        cmid = w1_ref.shape[1]
        acc1 = jnp.zeros((cmid, L), jnp.float32)
        for t, sh in enumerate(shifts):
            acc1 = acc1 + jnp.dot(w1_ref[t], x_ref[0, :, sh:sh + L],
                                  preferred_element_type=jnp.float32)
        y1 = jnp.maximum(acc1 + b1_ref[...], 0.0) * mask
        y1 = y1.astype(jnp.bfloat16)

        # Padded-flat y1 layout in VMEM (zero halo ring + tail, interior at
        # lane offset Wp+1) -- exactly what conv2's taps expect.
        y1_scr[...] = jnp.zeros_like(y1_scr)
        y1_scr[:, Wp + 1:Wp + 1 + L] = y1

        # ---- conv2 + bias + ReLU -------------------------------------------
        cout = w2_ref.shape[1]
        acc2 = jnp.zeros((cout, L), jnp.float32)
        for t, sh in enumerate(shifts):
            acc2 = acc2 + jnp.dot(w2_ref[t], y1_scr[:, sh:sh + L],
                                  preferred_element_type=jnp.float32)
        y2 = jnp.maximum(acc2 + b2_ref[...], 0.0) * mask
        y2b = y2.astype(jnp.bfloat16)
        y2f = y2b.astype(jnp.float32)          # stats on the stored values

        # ---- epilogue: store conv2 output + fused BN partial statistics -----
        y_ref[0] = y2b
        s1_ref[0] = jnp.sum(y2f, axis=1, keepdims=True)
        s2_ref[0] = jnp.sum(y2f * y2f, axis=1, keepdims=True)

    return kernel


# ---------------------------------------------------------------------------
# Wrapper: layout prep (small tensors only), pallas_call, fused BN epilogue
# ---------------------------------------------------------------------------
def residual_block_forward(x, w1, b1, w2, b2, gamma, beta, *, eps=1e-5):
    N, Cin, H, W = x.shape
    Cout = w1.shape[0]
    assert w1.shape == (Cout, Cin, 3, 3) and w2.shape == (Cout, Cout, 3, 3)

    Hp, Wp = H + 2, W + 2
    L = H * Wp                           # computed output columns per image
    Lp = _round_up(Hp * Wp + 2, 128)     # padded-flat image length (lane axis)

    Cin_p = _round_up(Cin, 16)           # bf16 sublane packing
    Cmid_p = _round_up(Cout, 16)
    Cout_p = _round_up(Cout, 16)

    # ---- small, one-time input-side preps (original-sized tensors only) ----
    xb = jnp.pad(x.astype(jnp.bfloat16),
                 ((0, 0), (0, Cin_p - Cin), (1, 1), (1, 1)))   # (N, Cin_p, Hp, Wp)
    xb = xb.reshape(N, Cin_p, Hp * Wp)
    xb = jnp.pad(xb, ((0, 0), (0, 0), (0, Lp - Hp * Wp)))      # (N, Cin_p, Lp)

    def prep_w(w, ci_p, co_p):
        co, ci = w.shape[0], w.shape[1]
        wt = jnp.transpose(w, (2, 3, 0, 1)).reshape(9, co, ci)  # tap-major
        wt = jnp.pad(wt, ((0, 0), (0, co_p - co), (0, ci_p - ci)))
        return wt.astype(jnp.bfloat16)

    w1t = prep_w(w1, Cin_p, Cmid_p)                            # (9, Cmid_p, Cin_p)
    w2t = prep_w(w2, Cmid_p, Cout_p)                           # (9, Cout_p, Cmid_p)
    b1c = jnp.pad(b1, (0, Cmid_p - Cout)).reshape(Cmid_p, 1).astype(jnp.float32)
    b2c = jnp.pad(b2, (0, Cout_p - Cout)).reshape(Cout_p, 1).astype(jnp.float32)
    mask = ((jnp.arange(L, dtype=jnp.int32) % Wp) < W).astype(jnp.float32)
    mask = mask.reshape(1, L)

    kernel = _make_resblock_kernel(Wp, L)

    # Scoped-VMEM sizing: double-buffered image/output tiles, resident weights,
    # scratch, f32 accumulators -- plus generous headroom, capped conservatively.
    vmem_est = (2 * Cin_p * Lp * 2
                + 9 * (Cmid_p * Cin_p + Cout_p * Cmid_p) * 2
                + (Cmid_p + Cout_p) * 4 + L * 4
                + 2 * Cout_p * L * 2 + 4 * Cout_p * 4
                + Cmid_p * Lp * 2 + (Cmid_p + Cout_p) * L * 4)
    vmem_limit = int(min(64 * 1024 * 1024, max(16 * 1024 * 1024, 4 * vmem_est)))

    y2, s1, s2 = pl.pallas_call(
        kernel,
        out_shape=(jax.ShapeDtypeStruct((N, Cout_p, L), jnp.bfloat16),
                   jax.ShapeDtypeStruct((N, Cout_p, 1), jnp.float32),
                   jax.ShapeDtypeStruct((N, Cout_p, 1), jnp.float32)),
        grid_spec=pltpu.PrefetchScalarGridSpec(
            num_scalar_prefetch=0,
            grid=(N,),
            in_specs=[
                pl.BlockSpec((1, Cin_p, Lp), lambda n: (n, 0, 0)),       # image n
                pl.BlockSpec((9, Cmid_p, Cin_p), lambda n: (0, 0, 0)),   # w1 (resident)
                pl.BlockSpec((Cmid_p, 1), lambda n: (0, 0)),             # b1
                pl.BlockSpec((9, Cout_p, Cmid_p), lambda n: (0, 0, 0)),  # w2 (resident)
                pl.BlockSpec((Cout_p, 1), lambda n: (0, 0)),             # b2
                pl.BlockSpec((1, L), lambda n: (0, 0)),                  # valid-col mask
            ],
            out_specs=(
                pl.BlockSpec((1, Cout_p, L), lambda n: (n, 0, 0)),       # y2 (bf16)
                pl.BlockSpec((1, Cout_p, 1), lambda n: (n, 0, 0)),       # sum
                pl.BlockSpec((1, Cout_p, 1), lambda n: (n, 0, 0)),       # sum of squares
            ),
            scratch_shapes=[pltpu.VMEM((Cmid_p, Lp), jnp.bfloat16)],
        ),
        compiler_params=pltpu.CompilerParams(
            dimension_semantics=("parallel",),
            vmem_limit_bytes=vmem_limit,
        ),
    )(xb, w1t, b1c, w2t, b2c, mask)

    # ---- BatchNorm2d: tiny cross-image reduction + fused scale/shift epilogue
    cnt = jnp.float32(N * H * W)
    ssum = jnp.sum(s1[:, :Cout, 0], axis=0)                    # (Cout,)
    ssq = jnp.sum(s2[:, :Cout, 0], axis=0)                     # (Cout,)
    mean = ssum / cnt
    var = jnp.maximum(ssq / cnt - mean * mean, 0.0)            # biased, like PyTorch BN
    scale = gamma * jax.lax.rsqrt(var + eps)
    shift = beta - mean * scale

    y = y2[:, :Cout, :].astype(jnp.float32).reshape(N, Cout, H, Wp)[:, :, :, :W]
    return y * scale.reshape(1, Cout, 1, 1) + shift.reshape(1, Cout, 1, 1)


# ---------------------------------------------------------------------------
# Pure-JAX reference (compute_dtype=bf16 mirrors the kernel's MXU precision)
# ---------------------------------------------------------------------------
def _reference(x, w1, b1, w2, b2, gamma, beta, eps=1e-5, compute_dtype=jnp.float32):
    def conv_relu(xx, w, b):
        y = jax.lax.conv_general_dilated(
            xx.astype(compute_dtype), w.astype(compute_dtype),
            window_strides=(1, 1), padding=((1, 1), (1, 1)),
            dimension_numbers=("NCHW", "OIHW", "NCHW"),
            preferred_element_type=jnp.float32)
        return jnp.maximum(y + b.reshape(1, -1, 1, 1).astype(jnp.float32), 0.0)

    y = conv_relu(x, w1, b1)
    y = conv_relu(y, w2, b2)
    if compute_dtype != jnp.float32:
        y = y.astype(compute_dtype).astype(jnp.float32)  # match kernel's stored dtype
    mean = y.mean(axis=(0, 2, 3), keepdims=True)
    var = y.var(axis=(0, 2, 3), keepdims=True)           # biased, like PyTorch BN fwd
    y = (y - mean) * jax.lax.rsqrt(var + eps)
    return y * gamma.reshape(1, -1, 1, 1) + beta.reshape(1, -1, 1, 1)


if __name__ == "__main__":
    key = jax.random.PRNGKey(0)
    kx, kw1, kb1, kw2, kb2, kg, kbt = jax.random.split(key, 7)

    N, Cin, H, W = 2, 4, 16, 16
    Cout = 8

    x = jax.random.normal(kx, (N, Cin, H, W), dtype=jnp.float32)
    bound1 = 1.0 / ((Cin * 9) ** 0.5)
    w1 = jax.random.uniform(kw1, (Cout, Cin, 3, 3), jnp.float32, -bound1, bound1)
    b1 = jax.random.uniform(kb1, (Cout,), jnp.float32, -bound1, bound1)
    bound2 = 1.0 / ((Cout * 9) ** 0.5)
    w2 = jax.random.uniform(kw2, (Cout, Cout, 3, 3), jnp.float32, -bound2, bound2)
    b2 = jax.random.uniform(kb2, (Cout,), jnp.float32, -bound2, bound2)
    gamma = 1.0 + 0.1 * jax.random.normal(kg, (Cout,), jnp.float32)
    beta = 0.1 * jax.random.normal(kbt, (Cout,), jnp.float32)

    out = jax.block_until_ready(
        jax.jit(residual_block_forward)(x, w1, b1, w2, b2, gamma, beta))
    assert out.shape == (N, Cout, H, W), out.shape

    # Check against a reference running at the same (bf16 MXU, f32 accum) precision.
    ref_b = jax.block_until_ready(
        _reference(x, w1, b1, w2, b2, gamma, beta, compute_dtype=jnp.bfloat16))
    err_b = float(jnp.max(jnp.abs(out - ref_b)))
    assert jnp.allclose(out, ref_b, atol=2e-2, rtol=2e-2), \
        f"mismatch vs bf16 reference, max_err={err_b}"

    # Report / loosely bound drift vs the full-f32 reference (bf16 rounding only).
    ref_f = jax.block_until_ready(_reference(x, w1, b1, w2, b2, gamma, beta))
    err_f = float(jnp.max(jnp.abs(out - ref_f)))
    assert err_f < 0.1, f"too far from f32 reference, max_err={err_f}"

    print("KERNEL_OK")
</pallas_src>

<mosaic_0001>
module attributes {stable_mosaic.version = 11 : i64} {
  func.func @kernel(%arg0: i32, %arg1: memref<1x16x384xbf16, #tpu.memory_space<vmem>>, %arg2: memref<9x16x16xbf16, #tpu.memory_space<vmem>>, %arg3: memref<16x1xf32, #tpu.memory_space<vmem>>, %arg4: memref<9x16x16xbf16, #tpu.memory_space<vmem>>, %arg5: memref<16x1xf32, #tpu.memory_space<vmem>>, %arg6: memref<1x288xf32, #tpu.memory_space<vmem>>, %arg7: memref<1x16x288xbf16, #tpu.memory_space<vmem>>, %arg8: memref<1x16x1xf32, #tpu.memory_space<vmem>>, %arg9: memref<1x16x1xf32, #tpu.memory_space<vmem>>, %arg10: memref<16x384xbf16, #tpu.memory_space<vmem>>) attributes {dimension_semantics = [#tpu.dimension_semantics<parallel>], iteration_bounds = array<i64: 2>, scalar_prefetch = 0 : i64, scratch_operands = 1 : i64, tpu.core_type = #tpu.core_type<tc>, window_params = [{transform_indices = @transform_0, window_bounds = array<i64: 1, 16, 384>}, {pipeline_mode = #tpu.pipeline_mode<synchronous>, transform_indices = @transform_1, window_bounds = array<i64: 9, 16, 16>}, {pipeline_mode = #tpu.pipeline_mode<synchronous>, transform_indices = @transform_2, window_bounds = array<i64: 16, 1>}, {pipeline_mode = #tpu.pipeline_mode<synchronous>, transform_indices = @transform_3, window_bounds = array<i64: 9, 16, 16>}, {pipeline_mode = #tpu.pipeline_mode<synchronous>, transform_indices = @transform_4, window_bounds = array<i64: 16, 1>}, {pipeline_mode = #tpu.pipeline_mode<synchronous>, transform_indices = @transform_5, window_bounds = array<i64: 1, 288>}, {transform_indices = @transform_6, window_bounds = array<i64: 1, 16, 288>}, {transform_indices = @transform_7, window_bounds = array<i64: 1, 16, 1>}, {transform_indices = @transform_8, window_bounds = array<i64: 1, 16, 1>}]} {
    %c0 = arith.constant 0 : index
    %c0_0 = arith.constant 0 : index
    %0 = vector.load %arg6[%c0, %c0_0] : memref<1x288xf32, #tpu.memory_space<vmem>>, vector<1x288xf32>
    %cst = arith.constant 0.000000e+00 : f32
    %1 = vector.broadcast %cst : f32 to vector<16x288xf32>
    %c0_1 = arith.constant 0 : index
    %c0_2 = arith.constant 0 : index
    %c0_3 = arith.constant 0 : index
    %2 = vector.load %arg2[%c0_1, %c0_2, %c0_3] : memref<9x16x16xbf16, #tpu.memory_space<vmem>>, vector<1x16x16xbf16>
    %3 = vector.shape_cast %2 : vector<1x16x16xbf16> to vector<16x16xbf16>
    %c0_4 = arith.constant 0 : index
    %c0_5 = arith.constant 0 : index
    %c0_6 = arith.constant 0 : index
    %4 = vector.load %arg1[%c0_4, %c0_5, %c0_6] : memref<1x16x384xbf16, #tpu.memory_space<vmem>>, vector<1x16x288xbf16>
    %5 = vector.shape_cast %4 : vector<1x16x288xbf16> to vector<16x288xbf16>
    %cst_7 = arith.constant dense<0.000000e+00> : vector<16x288xf32>
    %6 = tpu.matmul %3, %5, %cst_7 {dimension_numbers = #tpu.dot_dimension_numbers<[1], [0], [0], [1], [0, 0, 1, 1], [], []>} : vector<16x16xbf16>, vector<16x288xbf16>, vector<16x288xf32> -> vector<16x288xf32>
    %7 = arith.addf %1, %6 : vector<16x288xf32>
    %c1 = arith.constant 1 : index
    %c0_8 = arith.constant 0 : index
    %c0_9 = arith.constant 0 : index
    %8 = vector.load %arg2[%c1, %c0_8, %c0_9] : memref<9x16x16xbf16, #tpu.memory_space<vmem>>, vector<1x16x16xbf16>
    %9 = vector.shape_cast %8 : vector<1x16x16xbf16> to vector<16x16xbf16>
    %c0_10 = arith.constant 0 : index
    %c0_11 = arith.constant 0 : index
    %c1_12 = arith.constant 1 : index
    %10 = vector.load %arg1[%c0_10, %c0_11, %c1_12] : memref<1x16x384xbf16, #tpu.memory_space<vmem>>, vector<1x16x288xbf16>
    %11 = vector.shape_cast %10 : vector<1x16x288xbf16> to vector<16x288xbf16>
    %cst_13 = arith.constant dense<0.000000e+00> : vector<16x288xf32>
    %12 = tpu.matmul %9, %11, %cst_13 {dimension_numbers = #tpu.dot_dimension_numbers<[1], [0], [0], [1], [0, 0, 1, 1], [], []>} : vector<16x16xbf16>, vector<16x288xbf16>, vector<16x288xf32> -> vector<16x288xf32>
    %13 = arith.addf %7, %12 : vector<16x288xf32>
    %c2 = arith.constant 2 : index
    %c0_14 = arith.constant 0 : index
    %c0_15 = arith.constant 0 : index
    %14 = vector.load %arg2[%c2, %c0_14, %c0_15] : memref<9x16x16xbf16, #tpu.memory_space<vmem>>, vector<1x16x16xbf16>
    %15 = vector.shape_cast %14 : vector<1x16x16xbf16> to vector<16x16xbf16>
    %c0_16 = arith.constant 0 : index
    %c0_17 = arith.constant 0 : index
    %c2_18 = arith.constant 2 : index
    %16 = vector.load %arg1[%c0_16, %c0_17, %c2_18] : memref<1x16x384xbf16, #tpu.memory_space<vmem>>, vector<1x16x288xbf16>
    %17 = vector.shape_cast %16 : vector<1x16x288xbf16> to vector<16x288xbf16>
    %cst_19 = arith.constant dense<0.000000e+00> : vector<16x288xf32>
    %18 = tpu.matmul %15, %17, %cst_19 {dimension_numbers = #tpu.dot_dimension_numbers<[1], [0], [0], [1], [0, 0, 1, 1], [], []>} : vector<16x16xbf16>, vector<16x288xbf16>, vector<16x288xf32> -> vector<16x288xf32>
    %19 = arith.addf %13, %18 : vector<16x288xf32>
    %c3 = arith.constant 3 : index
    %c0_20 = arith.constant 0 : index
    %c0_21 = arith.constant 0 : index
    %20 = vector.load %arg2[%c3, %c0_20, %c0_21] : memref<9x16x16xbf16, #tpu.memory_space<vmem>>, vector<1x16x16xbf16>
    %21 = vector.shape_cast %20 : vector<1x16x16xbf16> to vector<16x16xbf16>
    %c0_22 = arith.constant 0 : index
    %c0_23 = arith.constant 0 : index
    %c18 = arith.constant 18 : index
    %22 = vector.load %arg1[%c0_22, %c0_23, %c18] : memref<1x16x384xbf16, #tpu.memory_space<vmem>>, vector<1x16x288xbf16>
    %23 = vector.shape_cast %22 : vector<1x16x288xbf16> to vector<16x288xbf16>
    %cst_24 = arith.constant dense<0.000000e+00> : vector<16x288xf32>
    %24 = tpu.matmul %21, %23, %cst_24 {dimension_numbers = #tpu.dot_dimension_numbers<[1], [0], [0], [1], [0, 0, 1, 1], [], []>} : vector<16x16xbf16>, vector<16x288xbf16>, vector<16x288xf32> -> vector<16x288xf32>
    %25 = arith.addf %19, %24 : vector<16x288xf32>
    %c4 = arith.constant 4 : index
    %c0_25 = arith.constant 0 : index
    %c0_26 = arith.constant 0 : index
    %26 = vector.load %arg2[%c4, %c0_25, %c0_26] : memref<9x16x16xbf16, #tpu.memory_space<vmem>>, vector<1x16x16xbf16>
    %27 = vector.shape_cast %26 : vector<1x16x16xbf16> to vector<16x16xbf16>
    %c0_27 = arith.constant 0 : index
    %c0_28 = arith.constant 0 : index
    %c19 = arith.constant 19 : index
    %28 = vector.load %arg1[%c0_27, %c0_28, %c19] : memref<1x16x384xbf16, #tpu.memory_space<vmem>>, vector<1x16x288xbf16>
    %29 = vector.shape_cast %28 : vector<1x16x288xbf16> to vector<16x288xbf16>
    %cst_29 = arith.constant dense<0.000000e+00> : vector<16x288xf32>
    %30 = tpu.matmul %27, %29, %cst_29 {dimension_numbers = #tpu.dot_dimension_numbers<[1], [0], [0], [1], [0, 0, 1, 1], [], []>} : vector<16x16xbf16>, vector<16x288xbf16>, vector<16x288xf32> -> vector<16x288xf32>
    %31 = arith.addf %25, %30 : vector<16x288xf32>
    %c5 = arith.constant 5 : index
    %c0_30 = arith.constant 0 : index
    %c0_31 = arith.constant 0 : index
    %32 = vector.load %arg2[%c5, %c0_30, %c0_31] : memref<9x16x16xbf16, #tpu.memory_space<vmem>>, vector<1x16x16xbf16>
    %33 = vector.shape_cast %32 : vector<1x16x16xbf16> to vector<16x16xbf16>
    %c0_32 = arith.constant 0 : index
    %c0_33 = arith.constant 0 : index
    %c20 = arith.constant 20 : index
    %34 = vector.load %arg1[%c0_32, %c0_33, %c20] : memref<1x16x384xbf16, #tpu.memory_space<vmem>>, vector<1x16x288xbf16>
    %35 = vector.shape_cast %34 : vector<1x16x288xbf16> to vector<16x288xbf16>
    %cst_34 = arith.constant dense<0.000000e+00> : vector<16x288xf32>
    %36 = tpu.matmul %33, %35, %cst_34 {dimension_numbers = #tpu.dot_dimension_numbers<[1], [0], [0], [1], [0, 0, 1, 1], [], []>} : vector<16x16xbf16>, vector<16x288xbf16>, vector<16x288xf32> -> vector<16x288xf32>
    %37 = arith.addf %31, %36 : vector<16x288xf32>
    %c6 = arith.constant 6 : index
    %c0_35 = arith.constant 0 : index
    %c0_36 = arith.constant 0 : index
    %38 = vector.load %arg2[%c6, %c0_35, %c0_36] : memref<9x16x16xbf16, #tpu.memory_space<vmem>>, vector<1x16x16xbf16>
    %39 = vector.shape_cast %38 : vector<1x16x16xbf16> to vector<16x16xbf16>
    %c0_37 = arith.constant 0 : index
    %c0_38 = arith.constant 0 : index
    %c36 = arith.constant 36 : index
    %40 = vector.load %arg1[%c0_37, %c0_38, %c36] : memref<1x16x384xbf16, #tpu.memory_space<vmem>>, vector<1x16x288xbf16>
    %41 = vector.shape_cast %40 : vector<1x16x288xbf16> to vector<16x288xbf16>
    %cst_39 = arith.constant dense<0.000000e+00> : vector<16x288xf32>
    %42 = tpu.matmul %39, %41, %cst_39 {dimension_numbers = #tpu.dot_dimension_numbers<[1], [0], [0], [1], [0, 0, 1, 1], [], []>} : vector<16x16xbf16>, vector<16x288xbf16>, vector<16x288xf32> -> vector<16x288xf32>
    %43 = arith.addf %37, %42 : vector<16x288xf32>
    %c7 = arith.constant 7 : index
    %c0_40 = arith.constant 0 : index
    %c0_41 = arith.constant 0 : index
    %44 = vector.load %arg2[%c7, %c0_40, %c0_41] : memref<9x16x16xbf16, #tpu.memory_space<vmem>>, vector<1x16x16xbf16>
    %45 = vector.shape_cast %44 : vector<1x16x16xbf16> to vector<16x16xbf16>
    %c0_42 = arith.constant 0 : index
    %c0_43 = arith.constant 0 : index
    %c37 = arith.constant 37 : index
    %46 = vector.load %arg1[%c0_42, %c0_43, %c37] : memref<1x16x384xbf16, #tpu.memory_space<vmem>>, vector<1x16x288xbf16>
    %47 = vector.shape_cast %46 : vector<1x16x288xbf16> to vector<16x288xbf16>
    %cst_44 = arith.constant dense<0.000000e+00> : vector<16x288xf32>
    %48 = tpu.matmul %45, %47, %cst_44 {dimension_numbers = #tpu.dot_dimension_numbers<[1], [0], [0], [1], [0, 0, 1, 1], [], []>} : vector<16x16xbf16>, vector<16x288xbf16>, vector<16x288xf32> -> vector<16x288xf32>
    %49 = arith.addf %43, %48 : vector<16x288xf32>
    %c8 = arith.constant 8 : index
    %c0_45 = arith.constant 0 : index
    %c0_46 = arith.constant 0 : index
    %50 = vector.load %arg2[%c8, %c0_45, %c0_46] : memref<9x16x16xbf16, #tpu.memory_space<vmem>>, vector<1x16x16xbf16>
    %51 = vector.shape_cast %50 : vector<1x16x16xbf16> to vector<16x16xbf16>
    %c0_47 = arith.constant 0 : index
    %c0_48 = arith.constant 0 : index
    %c38 = arith.constant 38 : index
    %52 = vector.load %arg1[%c0_47, %c0_48, %c38] : memref<1x16x384xbf16, #tpu.memory_space<vmem>>, vector<1x16x288xbf16>
    %53 = vector.shape_cast %52 : vector<1x16x288xbf16> to vector<16x288xbf16>
    %cst_49 = arith.constant dense<0.000000e+00> : vector<16x288xf32>
    %54 = tpu.matmul %51, %53, %cst_49 {dimension_numbers = #tpu.dot_dimension_numbers<[1], [0], [0], [1], [0, 0, 1, 1], [], []>} : vector<16x16xbf16>, vector<16x288xbf16>, vector<16x288xf32> -> vector<16x288xf32>
    %55 = arith.addf %49, %54 : vector<16x288xf32>
    %c0_50 = arith.constant 0 : index
    %c0_51 = arith.constant 0 : index
    %56 = vector.load %arg3[%c0_50, %c0_51] : memref<16x1xf32, #tpu.memory_space<vmem>>, vector<16x1xf32>
    %57 = vector.broadcast %56 : vector<16x1xf32> to vector<16x288xf32>
    %58 = arith.addf %55, %57 : vector<16x288xf32>
    %cst_52 = arith.constant 0.000000e+00 : f32
    %59 = vector.broadcast %cst_52 : f32 to vector<16x288xf32>
    %60 = arith.maximumf %58, %59 : vector<16x288xf32>
    %61 = vector.broadcast %0 : vector<1x288xf32> to vector<16x288xf32>
    %62 = arith.mulf %60, %61 : vector<16x288xf32>
    %63 = arith.truncf %62 : vector<16x288xf32> to vector<16x288xbf16>
    %cst_53 = arith.constant 0.000000e+00 : bf16
    %64 = vector.broadcast %cst_53 : bf16 to vector<16x384xbf16>
    %c0_54 = arith.constant 0 : index
    %c0_55 = arith.constant 0 : index
    %65 = vector.load %arg10[%c0_54, %c0_55] : memref<16x384xbf16, #tpu.memory_space<vmem>>, vector<16x384xbf16>
    tpu.vector_store %arg10[%c0_54, %c0_55], %64 {strides = array<i32>} : memref<16x384xbf16, #tpu.memory_space<vmem>>, vector<16x384xbf16>,
    %c0_56 = arith.constant 0 : index
    %c19_57 = arith.constant 19 : index
    %66 = vector.load %arg10[%c0_56, %c19_57] : memref<16x384xbf16, #tpu.memory_space<vmem>>, vector<16x288xbf16>
    tpu.vector_store %arg10[%c0_56, %c19_57], %63 {strides = array<i32>} : memref<16x384xbf16, #tpu.memory_space<vmem>>, vector<16x288xbf16>,
    %cst_58 = arith.constant 0.000000e+00 : f32
    %67 = vector.broadcast %cst_58 : f32 to vector<16x288xf32>
    %c0_59 = arith.constant 0 : index
    %c0_60 = arith.constant 0 : index
    %c0_61 = arith.constant 0 : index
    %68 = vector.load %arg4[%c0_59, %c0_60, %c0_61] : memref<9x16x16xbf16, #tpu.memory_space<vmem>>, vector<1x16x16xbf16>
    %69 = vector.shape_cast %68 : vector<1x16x16xbf16> to vector<16x16xbf16>
    %c0_62 = arith.constant 0 : index
    %c0_63 = arith.constant 0 : index
    %70 = vector.load %arg10[%c0_62, %c0_63] : memref<16x384xbf16, #tpu.memory_space<vmem>>, vector<16x288xbf16>
    %cst_64 = arith.constant dense<0.000000e+00> : vector<16x288xf32>
    %71 = tpu.matmul %69, %70, %cst_64 {dimension_numbers = #tpu.dot_dimension_numbers<[1], [0], [0], [1], [0, 0, 1, 1], [], []>} : vector<16x16xbf16>, vector<16x288xbf16>, vector<16x288xf32> -> vector<16x288xf32>
    %72 = arith.addf %67, %71 : vector<16x288xf32>
    %c1_65 = arith.constant 1 : index
    %c0_66 = arith.constant 0 : index
    %c0_67 = arith.constant 0 : index
    %73 = vector.load %arg4[%c1_65, %c0_66, %c0_67] : memref<9x16x16xbf16, #tpu.memory_space<vmem>>, vector<1x16x16xbf16>
    %74 = vector.shape_cast %73 : vector<1x16x16xbf16> to vector<16x16xbf16>
    %c0_68 = arith.constant 0 : index
    %c1_69 = arith.constant 1 : index
    %75 = vector.load %arg10[%c0_68, %c1_69] : memref<16x384xbf16, #tpu.memory_space<vmem>>, vector<16x288xbf16>
    %cst_70 = arith.constant dense<0.000000e+00> : vector<16x288xf32>
    %76 = tpu.matmul %74, %75, %cst_70 {dimension_numbers = #tpu.dot_dimension_numbers<[1], [0], [0], [1], [0, 0, 1, 1], [], []>} : vector<16x16xbf16>, vector<16x288xbf16>, vector<16x288xf32> -> vector<16x288xf32>
    %77 = arith.addf %72, %76 : vector<16x288xf32>
    %c2_71 = arith.constant 2 : index
    %c0_72 = arith.constant 0 : index
    %c0_73 = arith.constant 0 : index
    %78 = vector.load %arg4[%c2_71, %c0_72, %c0_73] : memref<9x16x16xbf16, #tpu.memory_space<vmem>>, vector<1x16x16xbf16>
    %79 = vector.shape_cast %78 : vector<1x16x16xbf16> to vector<16x16xbf16>
    %c0_74 = arith.constant 0 : index
    %c2_75 = arith.constant 2 : index
    %80 = vector.load %arg10[%c0_74, %c2_75] : memref<16x384xbf16, #tpu.memory_space<vmem>>, vector<16x288xbf16>
    %cst_76 = arith.constant dense<0.000000e+00> : vector<16x288xf32>
    %81 = tpu.matmul %79, %80, %cst_76 {dimension_numbers = #tpu.dot_dimension_numbers<[1], [0], [0], [1], [0, 0, 1, 1], [], []>} : vector<16x16xbf16>, vector<16x288xbf16>, vector<16x288xf32> -> vector<16x288xf32>
    %82 = arith.addf %77, %81 : vector<16x288xf32>
    %c3_77 = arith.constant 3 : index
    %c0_78 = arith.constant 0 : index
    %c0_79 = arith.constant 0 : index
    %83 = vector.load %arg4[%c3_77, %c0_78, %c0_79] : memref<9x16x16xbf16, #tpu.memory_space<vmem>>, vector<1x16x16xbf16>
    %84 = vector.shape_cast %83 : vector<1x16x16xbf16> to vector<16x16xbf16>
    %c0_80 = arith.constant 0 : index
    %c18_81 = arith.constant 18 : index
    %85 = vector.load %arg10[%c0_80, %c18_81] : memref<16x384xbf16, #tpu.memory_space<vmem>>, vector<16x288xbf16>
    %cst_82 = arith.constant dense<0.000000e+00> : vector<16x288xf32>
    %86 = tpu.matmul %84, %85, %cst_82 {dimension_numbers = #tpu.dot_dimension_numbers<[1], [0], [0], [1], [0, 0, 1, 1], [], []>} : vector<16x16xbf16>, vector<16x288xbf16>, vector<16x288xf32> -> vector<16x288xf32>
    %87 = arith.addf %82, %86 : vector<16x288xf32>
    %c4_83 = arith.constant 4 : index
    %c0_84 = arith.constant 0 : index
    %c0_85 = arith.constant 0 : index
    %88 = vector.load %arg4[%c4_83, %c0_84, %c0_85] : memref<9x16x16xbf16, #tpu.memory_space<vmem>>, vector<1x16x16xbf16>
    %89 = vector.shape_cast %88 : vector<1x16x16xbf16> to vector<16x16xbf16>
    %c0_86 = arith.constant 0 : index
    %c19_87 = arith.constant 19 : index
    %90 = vector.load %arg10[%c0_86, %c19_87] : memref<16x384xbf16, #tpu.memory_space<vmem>>, vector<16x288xbf16>
    %cst_88 = arith.constant dense<0.000000e+00> : vector<16x288xf32>
    %91 = tpu.matmul %89, %90, %cst_88 {dimension_numbers = #tpu.dot_dimension_numbers<[1], [0], [0], [1], [0, 0, 1, 1], [], []>} : vector<16x16xbf16>, vector<16x288xbf16>, vector<16x288xf32> -> vector<16x288xf32>
    %92 = arith.addf %87, %91 : vector<16x288xf32>
    %c5_89 = arith.constant 5 : index
    %c0_90 = arith.constant 0 : index
    %c0_91 = arith.constant 0 : index
    %93 = vector.load %arg4[%c5_89, %c0_90, %c0_91] : memref<9x16x16xbf16, #tpu.memory_space<vmem>>, vector<1x16x16xbf16>
    %94 = vector.shape_cast %93 : vector<1x16x16xbf16> to vector<16x16xbf16>
    %c0_92 = arith.constant 0 : index
    %c20_93 = arith.constant 20 : index
    %95 = vector.load %arg10[%c0_92, %c20_93] : memref<16x384xbf16, #tpu.memory_space<vmem>>, vector<16x288xbf16>
    %cst_94 = arith.constant dense<0.000000e+00> : vector<16x288xf32>
    %96 = tpu.matmul %94, %95, %cst_94 {dimension_numbers = #tpu.dot_dimension_numbers<[1], [0], [0], [1], [0, 0, 1, 1], [], []>} : vector<16x16xbf16>, vector<16x288xbf16>, vector<16x288xf32> -> vector<16x288xf32>
    %97 = arith.addf %92, %96 : vector<16x288xf32>
    %c6_95 = arith.constant 6 : index
    %c0_96 = arith.constant 0 : index
    %c0_97 = arith.constant 0 : index
    %98 = vector.load %arg4[%c6_95, %c0_96, %c0_97] : memref<9x16x16xbf16, #tpu.memory_space<vmem>>, vector<1x16x16xbf16>
    %99 = vector.shape_cast %98 : vector<1x16x16xbf16> to vector<16x16xbf16>
    %c0_98 = arith.constant 0 : index
    %c36_99 = arith.constant 36 : index
    %100 = vector.load %arg10[%c0_98, %c36_99] : memref<16x384xbf16, #tpu.memory_space<vmem>>, vector<16x288xbf16>
    %cst_100 = arith.constant dense<0.000000e+00> : vector<16x288xf32>
    %101 = tpu.matmul %99, %100, %cst_100 {dimension_numbers = #tpu.dot_dimension_numbers<[1], [0], [0], [1], [0, 0, 1, 1], [], []>} : vector<16x16xbf16>, vector<16x288xbf16>, vector<16x288xf32> -> vector<16x288xf32>
    %102 = arith.addf %97, %101 : vector<16x288xf32>
    %c7_101 = arith.constant 7 : index
    %c0_102 = arith.constant 0 : index
    %c0_103 = arith.constant 0 : index
    %103 = vector.load %arg4[%c7_101, %c0_102, %c0_103] : memref<9x16x16xbf16, #tpu.memory_space<vmem>>, vector<1x16x16xbf16>
    %104 = vector.shape_cast %103 : vector<1x16x16xbf16> to vector<16x16xbf16>
    %c0_104 = arith.constant 0 : index
    %c37_105 = arith.constant 37 : index
    %105 = vector.load %arg10[%c0_104, %c37_105] : memref<16x384xbf16, #tpu.memory_space<vmem>>, vector<16x288xbf16>
    %cst_106 = arith.constant dense<0.000000e+00> : vector<16x288xf32>
    %106 = tpu.matmul %104, %105, %cst_106 {dimension_numbers = #tpu.dot_dimension_numbers<[1], [0], [0], [1], [0, 0, 1, 1], [], []>} : vector<16x16xbf16>, vector<16x288xbf16>, vector<16x288xf32> -> vector<16x288xf32>
    %107 = arith.addf %102, %106 : vector<16x288xf32>
    %c8_107 = arith.constant 8 : index
    %c0_108 = arith.constant 0 : index
    %c0_109 = arith.constant 0 : index
    %108 = vector.load %arg4[%c8_107, %c0_108, %c0_109] : memref<9x16x16xbf16, #tpu.memory_space<vmem>>, vector<1x16x16xbf16>
    %109 = vector.shape_cast %108 : vector<1x16x16xbf16> to vector<16x16xbf16>
    %c0_110 = arith.constant 0 : index
    %c38_111 = arith.constant 38 : index
    %110 = vector.load %arg10[%c0_110, %c38_111] : memref<16x384xbf16, #tpu.memory_space<vmem>>, vector<16x288xbf16>
    %cst_112 = arith.constant dense<0.000000e+00> : vector<16x288xf32>
    %111 = tpu.matmul %109, %110, %cst_112 {dimension_numbers = #tpu.dot_dimension_numbers<[1], [0], [0], [1], [0, 0, 1, 1], [], []>} : vector<16x16xbf16>, vector<16x288xbf16>, vector<16x288xf32> -> vector<16x288xf32>
    %112 = arith.addf %107, %111 : vector<16x288xf32>
    %c0_113 = arith.constant 0 : index
    %c0_114 = arith.constant 0 : index
    %113 = vector.load %arg5[%c0_113, %c0_114] : memref<16x1xf32, #tpu.memory_space<vmem>>, vector<16x1xf32>
    %114 = vector.broadcast %113 : vector<16x1xf32> to vector<16x288xf32>
    %115 = arith.addf %112, %114 : vector<16x288xf32>
    %cst_115 = arith.constant 0.000000e+00 : f32
    %116 = vector.broadcast %cst_115 : f32 to vector<16x288xf32>
    %117 = arith.maximumf %115, %116 : vector<16x288xf32>
    %118 = vector.broadcast %0 : vector<1x288xf32> to vector<16x288xf32>
    %119 = arith.mulf %117, %118 : vector<16x288xf32>
    %120 = arith.truncf %119 : vector<16x288xf32> to vector<16x288xbf16>
    %121 = arith.extf %120 : vector<16x288xbf16> to vector<16x288xf32>
    %c0_116 = arith.constant 0 : index
    %c0_117 = arith.constant 0 : index
    %c0_118 = arith.constant 0 : index
    %122 = vector.load %arg7[%c0_116, %c0_117, %c0_118] : memref<1x16x288xbf16, #tpu.memory_space<vmem>>, vector<1x16x288xbf16>
    %123 = vector.shape_cast %122 : vector<1x16x288xbf16> to vector<16x288xbf16>
    %124 = vector.shape_cast %120 : vector<16x288xbf16> to vector<1x16x288xbf16>
    tpu.vector_store %arg7[%c0_116, %c0_117, %c0_118], %124 {strides = array<i32>} : memref<1x16x288xbf16, #tpu.memory_space<vmem>>, vector<1x16x288xbf16>,
    %cst_119 = arith.constant dense<0.000000e+00> : vector<16xf32>
    %125 = vector.multi_reduction <add>, %121, %cst_119 [1] : vector<16x288xf32> to vector<16xf32>
    %126 = vector.shape_cast %125 : vector<16xf32> to vector<16x1xf32>
    %c0_120 = arith.constant 0 : index
    %c0_121 = arith.constant 0 : index
    %c0_122 = arith.constant 0 : index
    %127 = vector.load %arg8[%c0_120, %c0_121, %c0_122] : memref<1x16x1xf32, #tpu.memory_space<vmem>>, vector<1x16x1xf32>
    %128 = vector.shape_cast %127 : vector<1x16x1xf32> to vector<16x1xf32>
    %129 = vector.shape_cast %126 : vector<16x1xf32> to vector<1x16x1xf32>
    tpu.vector_store %arg8[%c0_120, %c0_121, %c0_122], %129 {strides = array<i32>} : memref<1x16x1xf32, #tpu.memory_space<vmem>>, vector<1x16x1xf32>,
    %130 = arith.mulf %121, %121 : vector<16x288xf32>
    %cst_123 = arith.constant dense<0.000000e+00> : vector<16xf32>
    %131 = vector.multi_reduction <add>, %130, %cst_123 [1] : vector<16x288xf32> to vector<16xf32>
    %132 = vector.shape_cast %131 : vector<16xf32> to vector<16x1xf32>
    %c0_124 = arith.constant 0 : index
    %c0_125 = arith.constant 0 : index
    %c0_126 = arith.constant 0 : index
    %133 = vector.load %arg9[%c0_124, %c0_125, %c0_126] : memref<1x16x1xf32, #tpu.memory_space<vmem>>, vector<1x16x1xf32>
    %134 = vector.shape_cast %133 : vector<1x16x1xf32> to vector<16x1xf32>
    %135 = vector.shape_cast %132 : vector<16x1xf32> to vector<1x16x1xf32>
    tpu.vector_store %arg9[%c0_124, %c0_125, %c0_126], %135 {strides = array<i32>} : memref<1x16x1xf32, #tpu.memory_space<vmem>>, vector<1x16x1xf32>,
    return
  }
  func.func @transform_0(%arg0: i32) -> (i32, i32, i32) {
    %c0_i32 = arith.constant 0 : i32
    %c0_i32_0 = arith.constant 0 : i32
    %c0_i32_1 = arith.constant 0 : i32
    return %arg0, %c0_i32, %c0_i32_0 : i32, i32, i32
  }
  func.func @transform_1(%arg0: i32) -> (i32, i32, i32) {
    %c0_i32 = arith.constant 0 : i32
    %c0_i32_0 = arith.constant 0 : i32
    %c0_i32_1 = arith.constant 0 : i32
    %c0_i32_2 = arith.constant 0 : i32
    return %c0_i32, %c0_i32_0, %c0_i32_1 : i32, i32, i32
  }
  func.func @transform_2(%arg0: i32) -> (i32, i32) {
    %c0_i32 = arith.constant 0 : i32
    %c0_i32_0 = arith.constant 0 : i32
    %c0_i32_1 = arith.constant 0 : i32
    return %c0_i32, %c0_i32_0 : i32, i32
  }
  func.func @transform_3(%arg0: i32) -> (i32, i32, i32) {
    %c0_i32 = arith.constant 0 : i32
    %c0_i32_0 = arith.constant 0 : i32
    %c0_i32_1 = arith.constant 0 : i32
    %c0_i32_2 = arith.constant 0 : i32
    return %c0_i32, %c0_i32_0, %c0_i32_1 : i32, i32, i32
  }
  func.func @transform_4(%arg0: i32) -> (i32, i32) {
    %c0_i32 = arith.constant 0 : i32
    %c0_i32_0 = arith.constant 0 : i32
    %c0_i32_1 = arith.constant 0 : i32
    return %c0_i32, %c0_i32_0 : i32, i32
  }
  func.func @transform_5(%arg0: i32) -> (i32, i32) {
    %c0_i32 = arith.constant 0 : i32
    %c0_i32_0 = arith.constant 0 : i32
    %c0_i32_1 = arith.constant 0 : i32
    return %c0_i32, %c0_i32_0 : i32, i32
  }
  func.func @transform_6(%arg0: i32) -> (i32, i32, i32) {
    %c0_i32 = arith.constant 0 : i32
    %c0_i32_0 = arith.constant 0 : i32
    %c0_i32_1 = arith.constant 0 : i32
    return %arg0, %c0_i32, %c0_i32_0 : i32, i32, i32
  }
  func.func @transform_7(%arg0: i32) -> (i32, i32, i32) {
    %c0_i32 = arith.constant 0 : i32
    %c0_i32_0 = arith.constant 0 : i32
    %c0_i32_1 = arith.constant 0 : i32
    return %arg0, %c0_i32, %c0_i32_0 : i32, i32, i32
  }
  func.func @transform_8(%arg0: i32) -> (i32, i32, i32) {
    %c0_i32 = arith.constant 0 : i32
    %c0_i32_0 = arith.constant 0 : i32
    %c0_i32_1 = arith.constant 0 : i32
    return %arg0, %c0_i32, %c0_i32_0 : i32, i32, i32
  }
}

</mosaic_0001>

<llo_original>
// kernel: residual_block_forward.1
$region0: #{residual_block_forward.1}
  #allocation0 [shape = 'u32[]', space=smem, size = 0x4, offset = 0x4, fixed_abs, tag = 'smem constant byte address 0x4 - core index']
  #allocation1 [shape = 'u32[72,128]{1,0:T(1,128)}', space=vmem, size = 0x9000, scoped, tag = 'internal scratch']
  #allocation2 [shape = 'bf16[16,384]{1,0:T(8,128)(2,1)}', space=vmem, size = 0x3000, scoped, tag = 'scratch operand']
  %s0 = inlined_call_operand.vmem [shape: bf16[2,16,384], index: 0, kind: input, shape index: {}]
  %s1 = inlined_call_operand.vmem [shape: bf16[9,16,16], index: 1, kind: input, shape index: {}]
  %s2 = inlined_call_operand.vmem [shape: f32[16,1], index: 2, kind: input, shape index: {}]
  %s3 = inlined_call_operand.vmem [shape: bf16[9,16,16], index: 3, kind: input, shape index: {}]
  %s4 = inlined_call_operand.vmem [shape: f32[16,1], index: 4, kind: input, shape index: {}]
  %s5 = inlined_call_operand.vmem [shape: f32[1,288], index: 5, kind: input, shape index: {}]
  %s6 = inlined_call_operand.vmem [shape: bf16[2,16,288], index: 6, kind: output, shape index: {0}]
  %s7 = inlined_call_operand.vmem [shape: f32[2,16,1], index: 7, kind: output, shape index: {1}]
  %s8 = inlined_call_operand.vmem [shape: f32[2,16,1], index: 8, kind: output, shape index: {2}]
  %9 = xla_tuple %s6, %s7, %s8
  %s10 = sld [smem:[#allocation0]]
  $region73: #{residual_block_forward.1} parent=0
    _
  %s12 = ssub.s32 1, %s10
  %s13 = scalar_select 0, %s12, %s10
  loop: start=0, step=1, limit=4
  $region2: #{residual_block_forward.1} parent=0 // loop_pre_header
    _
  $region3: #{residual_block_forward.1} parent=0 // loop_header
    %s15 = sphi 0, %s19
    %p16 = scmp.ge.s32.totalorder %s15, 4
    %s25 = sphi 0, %s27
    %s28 = sphi 0, %s25
    %s29 = sphi 0, %s28
    %s45 = sphi 0, %s29
    %s49 = sphi 0, %s49
    %s51 = sphi 0, %s49
    %s52 = sphi 0, %s51
    %s66 = sphi 0, %s52
    %s70 = sphi 0, %s70
    %s72 = sphi 0, %s70
    %s73 = sphi 0, %s72
    %s87 = sphi 0, %s73
    %s91 = sphi 0, %s91
    %s93 = sphi 0, %s91
    %s94 = sphi 0, %s93
    %s108 = sphi 0, %s94
    %s112 = sphi 0, %s112
    %s114 = sphi 0, %s112
    %s115 = sphi 0, %s114
    %s129 = sphi 0, %s115
    %s133 = sphi 0, %s133
    %s135 = sphi 0, %s133
    %s136 = sphi 0, %s135
    %s150 = sphi 0, %s136
    %s156 = sphi 0, %s158
    %s159 = sphi 0, %s156
    %s160 = sphi 0, %s159
    %s176 = sphi 0, %s160
    %s182 = sphi 0, %s184
    %s185 = sphi 0, %s182
    %s186 = sphi 0, %s185
    %s202 = sphi 0, %s186
    %s208 = sphi 0, %s210
    %s211 = sphi 0, %s208
    %s212 = sphi 0, %s211
    %s228 = sphi 0, %s212
  $region4: #{residual_block_forward.1} parent=0 // loop_header_branch
    %18 = sbr.rel (%p16) target = $region8
  $region5: #{residual_block_forward.1} parent=0 // loop_body
    %s20 = ssub.s32 %s15, 1
    %s21 = ssub.s32 %s15, 2
    %s22 = sadd.s32 %s15, 1
    %s23 = ssub.s32 %s15, %s22
    %p24 = scmp.eq.s32.totalorder %s23, 0
    %s26 = sadd.s32 %s25, 1
    %s27 = scalar_select %p24, %s25, %s26
    %p30 = pneg %p24
    %p31 = scmp.eq.s32.totalorder %s15, 1
    %p32 = por %p30, %p31
    %p33 = scmp.ne.s32.totalorder %s25, %s28
    %p34 = scmp.eq.s32.totalorder %s15, 0
    %p35 = por %p33, %p34
    %p36 = scmp.ne.s32.totalorder %s25, %s28
    %p37 = scmp.eq.s32.totalorder %s20, 1
    %p38 = por %p36, %p37
    %p39 = scmp.ne.s32.totalorder %s28, %s29
    %p40 = scmp.eq.s32.totalorder %s20, 0
    %p41 = por %p39, %p40
    %p42 = scmp.ne.s32.totalorder %s28, %s29
    %p43 = scmp.eq.s32.totalorder %s21, 1
    %p44 = por %p42, %p43
    %p46 = scmp.ne.s32.totalorder %s29, %s45
    %p47 = scmp.eq.s32.totalorder %s21, 0
    %p48 = por %p46, %p47
    %s50 = sadd.s32 %s49, 1
    %p53 = scmp.eq.s32.totalorder %s15, 1
    %p54 = scmp.ne.s32.totalorder %s49, %s51
    %p55 = scmp.eq.s32.totalorder %s15, 0
    %p56 = por %p54, %p55
    %p57 = scmp.ne.s32.totalorder %s49, %s51
    %p58 = scmp.eq.s32.totalorder %s20, 1
    %p59 = por %p57, %p58
    %p60 = scmp.ne.s32.totalorder %s51, %s52
    %p61 = scmp.eq.s32.totalorder %s20, 0
    %p62 = por %p60, %p61
    %p63 = scmp.ne.s32.totalorder %s51, %s52
    %p64 = scmp.eq.s32.totalorder %s21, 1
    %p65 = por %p63, %p64
    %p67 = scmp.ne.s32.totalorder %s52, %s66
    %p68 = scmp.eq.s32.totalorder %s21, 0
    %p69 = por %p67, %p68
    %s71 = sadd.s32 %s70, 1
    %p74 = scmp.eq.s32.totalorder %s15, 1
    %p75 = scmp.ne.s32.totalorder %s70, %s72
    %p76 = scmp.eq.s32.totalorder %s15, 0
    %p77 = por %p75, %p76
    %p78 = scmp.ne.s32.totalorder %s70, %s72
    %p79 = scmp.eq.s32.totalorder %s20, 1
    %p80 = por %p78, %p79
    %p81 = scmp.ne.s32.totalorder %s72, %s73
    %p82 = scmp.eq.s32.totalorder %s20, 0
    %p83 = por %p81, %p82
    %p84 = scmp.ne.s32.totalorder %s72, %s73
    %p85 = scmp.eq.s32.totalorder %s21, 1
    %p86 = por %p84, %p85
    %p88 = scmp.ne.s32.totalorder %s73, %s87
    %p89 = scmp.eq.s32.totalorder %s21, 0
    %p90 = por %p88, %p89
    %s92 = sadd.s32 %s91, 1
    %p95 = scmp.eq.s32.totalorder %s15, 1
    %p96 = scmp.ne.s32.totalorder %s91, %s93
    %p97 = scmp.eq.s32.totalorder %s15, 0
    %p98 = por %p96, %p97
    %p99 = scmp.ne.s32.totalorder %s91, %s93
    %p100 = scmp.eq.s32.totalorder %s20, 1
    %p101 = por %p99, %p100
    %p102 = scmp.ne.s32.totalorder %s93, %s94
    %p103 = scmp.eq.s32.totalorder %s20, 0
    %p104 = por %p102, %p103
    %p105 = scmp.ne.s32.totalorder %s93, %s94
    %p106 = scmp.eq.s32.totalorder %s21, 1
    %p107 = por %p105, %p106
    %p109 = scmp.ne.s32.totalorder %s94, %s108
    %p110 = scmp.eq.s32.totalorder %s21, 0
    %p111 = por %p109, %p110
    %s113 = sadd.s32 %s112, 1
    %p116 = scmp.eq.s32.totalorder %s15, 1
    %p117 = scmp.ne.s32.totalorder %s112, %s114
    %p118 = scmp.eq.s32.totalorder %s15, 0
    %p119 = por %p117, %p118
    %p120 = scmp.ne.s32.totalorder %s112, %s114
    %p121 = scmp.eq.s32.totalorder %s20, 1
    %p122 = por %p120, %p121
    %p123 = scmp.ne.s32.totalorder %s114, %s115
    %p124 = scmp.eq.s32.totalorder %s20, 0
    %p125 = por %p123, %p124
    %p126 = scmp.ne.s32.totalorder %s114, %s115
    %p127 = scmp.eq.s32.totalorder %s21, 1
    %p128 = por %p126, %p127
    %p130 = scmp.ne.s32.totalorder %s115, %s129
    %p131 = scmp.eq.s32.totalorder %s21, 0
    %p132 = por %p130, %p131
    %s134 = sadd.s32 %s133, 1
    %p137 = scmp.eq.s32.totalorder %s15, 1
    %p138 = scmp.ne.s32.totalorder %s133, %s135
    %p139 = scmp.eq.s32.totalorder %s15, 0
    %p140 = por %p138, %p139
    %p141 = scmp.ne.s32.totalorder %s133, %s135
    %p142 = scmp.eq.s32.totalorder %s20, 1
    %p143 = por %p141, %p142
    %p144 = scmp.ne.s32.totalorder %s135, %s136
    %p145 = scmp.eq.s32.totalorder %s20, 0
    %p146 = por %p144, %p145
    %p147 = scmp.ne.s32.totalorder %s135, %s136
    %p148 = scmp.eq.s32.totalorder %s21, 1
    %p149 = por %p147, %p148
    %p151 = scmp.ne.s32.totalorder %s136, %s150
    %p152 = scmp.eq.s32.totalorder %s21, 0
    %p153 = por %p151, %p152
    %s154 = ssub.s32 %s15, %s22
    %p155 = scmp.eq.s32.totalorder %s154, 0
    %s157 = sadd.s32 %s156, 1
    %s158 = scalar_select %p155, %s156, %s157
    %p161 = pneg %p155
    %p162 = scmp.eq.s32.totalorder %s15, 1
    %p163 = por %p161, %p162
    %p164 = scmp.ne.s32.totalorder %s156, %s159
    %p165 = scmp.eq.s32.totalorder %s15, 0
    %p166 = por %p164, %p165
    %p167 = scmp.ne.s32.totalorder %s156, %s159
    %p168 = scmp.eq.s32.totalorder %s20, 1
    %p169 = por %p167, %p168
    %p170 = scmp.ne.s32.totalorder %s159, %s160
    %p171 = scmp.eq.s32.totalorder %s20, 0
    %p172 = por %p170, %p171
    %p173 = scmp.ne.s32.totalorder %s159, %s160
    %p174 = scmp.eq.s32.totalorder %s21, 1
    %p175 = por %p173, %p174
    %p177 = scmp.ne.s32.totalorder %s160, %s176
    %p178 = scmp.eq.s32.totalorder %s21, 0
    %p179 = por %p177, %p178
    %s180 = ssub.s32 %s15, %s22
    %p181 = scmp.eq.s32.totalorder %s180, 0
    %s183 = sadd.s32 %s182, 1
    %s184 = scalar_select %p181, %s182, %s183
    %p187 = pneg %p181
    %p188 = scmp.eq.s32.totalorder %s15, 1
    %p189 = por %p187, %p188
    %p190 = scmp.ne.s32.totalorder %s182, %s185
    %p191 = scmp.eq.s32.totalorder %s15, 0
    %p192 = por %p190, %p191
    %p193 = scmp.ne.s32.totalorder %s182, %s185
    %p194 = scmp.eq.s32.totalorder %s20, 1
    %p195 = por %p193, %p194
    %p196 = scmp.ne.s32.totalorder %s185, %s186
    %p197 = scmp.eq.s32.totalorder %s20, 0
    %p198 = por %p196, %p197
    %p199 = scmp.ne.s32.totalorder %s185, %s186
    %p200 = scmp.eq.s32.totalorder %s21, 1
    %p201 = por %p199, %p200
    %p203 = scmp.ne.s32.totalorder %s186, %s202
    %p204 = scmp.eq.s32.totalorder %s21, 0
    %p205 = por %p203, %p204
    %s206 = ssub.s32 %s15, %s22
    %p207 = scmp.eq.s32.totalorder %s206, 0
    %s209 = sadd.s32 %s208, 1
    %s210 = scalar_select %p207, %s208, %s209
    %p213 = pneg %p207
    %p214 = scmp.eq.s32.totalorder %s15, 1
    %p215 = por %p213, %p214
    %p216 = scmp.ne.s32.totalorder %s208, %s211
    %p217 = scmp.eq.s32.totalorder %s15, 0
    %p218 = por %p216, %p217
    %p219 = scmp.ne.s32.totalorder %s208, %s211
    %p220 = scmp.eq.s32.totalorder %s20, 1
    %p221 = por %p219, %p220
    %p222 = scmp.ne.s32.totalorder %s211, %s212
    %p223 = scmp.eq.s32.totalorder %s20, 0
    %p224 = por %p222, %p223
    %p225 = scmp.ne.s32.totalorder %s211, %s212
    %p226 = scmp.eq.s32.totalorder %s21, 1
    %p227 = por %p225, %p226
    %p229 = scmp.ne.s32.totalorder %s212, %s228
    %p230 = scmp.eq.s32.totalorder %s21, 0
    %p231 = por %p229, %p230
    %p232 = scmp.le.s32.totalorder 1, %s15
    %p233 = scmp.lt.s32.totalorder %s15, 3
    %p234 = pnand %p232, %p233
    %p235 = pneg %p234
    // Predicated region
    $region9: #{residual_block_forward.1} parent=5 // pred_check
      _
    $region10: #{residual_block_forward.1} parent=5 // pred_check_branch
      %237 = sbr.rel (%p234) target = $region12
    $region11: #{residual_block_forward.1} parent=5 // pred_region
      %s238 = ssub.s32 %s15, 1
      // Predicated region
      $region13: #{residual_block_forward.1} parent=11 // pred_check
        %p239 = pneg %p62
      $region14: #{residual_block_forward.1} parent=11 // pred_check_branch
        %241 = sbr.rel (%p239) target = $region16
      $region15: #{residual_block_forward.1} parent=11 // pred_region
        _
      $region16: #{residual_block_forward.1} parent=11 // pred_fallthru
        _
      // Predicated region
      $region17: #{residual_block_forward.1} parent=11 // pred_check
        %p242 = pneg %p83
      $region18: #{residual_block_forward.1} parent=11 // pred_check_branch
        %244 = sbr.rel (%p242) target = $region20
      $region19: #{residual_block_forward.1} parent=11 // pred_region
        _
      $region20: #{residual_block_forward.1} parent=11 // pred_fallthru
        _
      // Predicated region
      $region21: #{residual_block_forward.1} parent=11 // pred_check
        %p245 = pneg %p104
      $region22: #{residual_block_forward.1} parent=11 // pred_check_branch
        %247 = sbr.rel (%p245) target = $region24
      $region23: #{residual_block_forward.1} parent=11 // pred_region
        _
      $region24: #{residual_block_forward.1} parent=11 // pred_fallthru
        _
      // Predicated region
      $region25: #{residual_block_forward.1} parent=11 // pred_check
        %p248 = pneg %p125
      $region26: #{residual_block_forward.1} parent=11 // pred_check_branch
        %250 = sbr.rel (%p248) target = $region28
      $region27: #{residual_block_forward.1} parent=11 // pred_region
        _
      $region28: #{residual_block_forward.1} parent=11 // pred_fallthru
        _
      // Predicated region
      $region29: #{residual_block_forward.1} parent=11 // pred_check
        %p251 = pneg %p146
      $region30: #{residual_block_forward.1} parent=11 // pred_check_branch
        %253 = sbr.rel (%p251) target = $region32
      $region31: #{residual_block_forward.1} parent=11 // pred_region
        _
      $region32: #{residual_block_forward.1} parent=11 // pred_fallthru
        _
    $region12: #{residual_block_forward.1} parent=5 // pred_fallthru
      _
    %p254 = scmp.lt.s32.totalorder %s15, 2
    // Predicated region
    $region33: #{residual_block_forward.1} parent=5 // pred_check
      %p255 = pneg %p254
    $region34: #{residual_block_forward.1} parent=5 // pred_check_branch
      %257 = sbr.rel (%p255) target = $region36
    $region35: #{residual_block_forward.1} parent=5 // pred_region
      // Predicated region
      $region37: #{residual_block_forward.1} parent=35 // pred_check
        %p258 = pneg %p35
      $region38: #{residual_block_forward.1} parent=35 // pred_check_branch
        %260 = sbr.rel (%p258) target = $region40
      $region39: #{residual_block_forward.1} parent=35 // pred_region
        %p261 = scmp.lt.s32.totalorder %s15, 1
        %s262 = scalar_select %p261, %s15, 1
        %s263 = smul.addr %s262, 6
        %s264 = smul.addr %s263, 4
        %s265 = scalar_lea.vmem %s0, %s264
      $region40: #{residual_block_forward.1} parent=35 // pred_fallthru
        _
    $region36: #{residual_block_forward.1} parent=5 // pred_fallthru
      _
    %p266 = scmp.le.s32.totalorder 1, %s15
    %p267 = scmp.lt.s32.totalorder %s15, 3
    %p268 = pnand %p266, %p267
    %p269 = pneg %p268
    // Predicated region
    $region41: #{residual_block_forward.1} parent=5 // pred_check
      _
    $region42: #{residual_block_forward.1} parent=5 // pred_check_branch
      %271 = sbr.rel (%p268) target = $region44
    $region43: #{residual_block_forward.1} parent=5 // pred_region
      %s272 = ssub.s32 %s15, 1
      %p273 = scmp.lt.s32.totalorder %s20, 1
      %s274 = scalar_select %p273, %s20, 1
      %s275 = smul.addr %s274, 6
      %s276 = smul.addr %s275, 4
      %s277 = scalar_lea.vmem %s0, %s276
      %p278 = pneg %p41
      %p279 = pneg %p38
      %p280 = pneg %p62
      %p281 = pneg %p59
      %p282 = pneg %p83
      %p283 = pneg %p80
      %p284 = pneg %p104
      %p285 = pneg %p101
      %p286 = pneg %p125
      %p287 = pneg %p122
      %p288 = pneg %p146
      %p289 = pneg %p143
      %p290 = pneg %p172
      %p291 = pneg %p169
      %p292 = scmp.lt.s32.totalorder %s20, 1
      %s293 = scalar_select %p292, %s20, 1
      %s294 = smul.addr %s293, 6
      %s295 = smul.addr %s294, 4
      %s296 = scalar_lea.vmem %s6, %s295
      %p297 = pneg %p198
      %p298 = pneg %p195
      %p299 = scmp.lt.s32.totalorder %s20, 1
      %s300 = scalar_select %p299, %s20, 1
      %s301 = smul.addr %s300, 2
      %s302 = smul.addr %s301, 8
      %s303 = scalar_lea.vmem %s7, %s302
      %p304 = pneg %p224
      %p305 = pneg %p221
      %p306 = scmp.lt.s32.totalorder %s20, 1
      %s307 = scalar_select %p306, %s20, 1
      %s308 = smul.addr %s307, 2
      %s309 = smul.addr %s308, 8
      %s310 = scalar_lea.vmem %s8, %s309
      %p311 = scmp.lt.s32.totalorder %s20, 1
      %s312 = scalar_select %p311, %s20, 1
      %s313 = smul.addr %s312, 6
      %s314 = smul.addr %s313, 4
      %s315 = scalar_lea.vmem %s0, %s314
      %p316 = scmp.lt.s32.totalorder %s20, 1
      %s317 = scalar_select %p316, %s20, 1
      %s318 = smul.addr %s317, 6
      %s319 = smul.addr %s318, 4
      %s320 = scalar_lea.vmem %s6, %s319
      %p321 = scmp.lt.s32.totalorder %s20, 1
      %s322 = scalar_select %p321, %s20, 1
      %s323 = smul.addr %s322, 2
      %s324 = smul.addr %s323, 8
      %s325 = scalar_lea.vmem %s7, %s324
      %p326 = scmp.lt.s32.totalorder %s20, 1
      %s327 = scalar_select %p326, %s20, 1
      %s328 = smul.addr %s327, 2
      %s329 = smul.addr %s328, 8
      %s330 = scalar_lea.vmem %s8, %s329
      %v332 = vld [vmem:[%s5] sm:$0x7]
      %v333 = vld [vmem:[%s1] sm:$0xf]
      %v334 = vld [vmem:[%s1 + $0x4] sm:$0xf]
      %v335 = vld [vmem:[%s315] sm:$0xff]
      %v336 = vld [vmem:[%s315 + $0x8] sm:$0xf]
      %v337 = vld [vmem:[%s315 + $0xc] sm:$0xff]
      %v338 = vld [vmem:[%s315 + $0x14] sm:$0xf]
      %s339 = scalar_lea.vmem %s1, 8
      %v340 = vld [vmem:[%s339] sm:$0xf]
      %v341 = vld [vmem:[%s339 + $0x4] sm:$0xf]
      %v344 = vunpack.c.l.b16 %v340
      %v345 = vunpack.c.l.b16 %v341
      %v346 = vpack.c.b16 %v345, %v344
      %v351 = vunpack.c.l.b16 %v335
      %v352 = vunpack.c.h.b16 %v335
      %v353 = vunpack.c.l.b16 %v336
      %v354 = vunpack.c.l.b16 %v337
      %v355 = vunpack.c.h.b16 %v337
      %v356 = vunpack.c.l.b16 %v338
      %v357 = vpack.c.b16 %v354, %v351
      %v358 = vpack.c.b16 %v355, %v352
      %v359 = vpack.c.b16 %v356, %v353
      %360 = vrot.lane.b32.xlu0 %v357, 127
      %v361 = vpop.permute.xlu0 %360
      %362 = vrot.lane.b32.xlu0 %v358, 127
      %v363 = vpop.permute.xlu0 %362
      %364 = vrot.lane.b32.xlu0 %v359, 127
      %v365 = vpop.permute.xlu0 %364
      %vm366 = vcmask 1039360
      %v367 = vsel %vm366, %v361, %v363
      %v368 = vsel %vm366, %v363, %v365
      %vm372 = vcmask 130048
      %v374 = vsel %vm372, %v346, 0
      %376 = vmatpush.bf16.msra.mxu0 0
      %377 = vmatpush.bf16.msra.mxu0 0
      %378 = vmatpush.bf16.msra.mxu0 0
      %379 = vmatpush.bf16.msra.mxu0 0
      %380 = vmatpush.bf16.msra.mxu0 0
      %381 = vmatpush.bf16.msra.mxu0 0
      %382 = vmatpush.bf16.msra.mxu0 0
      %383 = vmatpush.bf16.msra.mxu0 %v367
      %384 = vmatmul.bf16.gmra.mxu0 %v374
      %v385 = vpop.f32.mrf.mxu0
      %v386 = vadd.f32 0.0, %v385
      %v387 = vpop.f32.mrf.mxu0
      %v388 = vadd.f32 0.0, %v387
      %389 = vdwg.mxu0
      %390 = vmatpush.bf16.msra.mxu0 0
      %391 = vmatpush.bf16.msra.mxu0 0
      %392 = vmatpush.bf16.msra.mxu0 0
      %393 = vmatpush.bf16.msra.mxu0 0
      %394 = vmatpush.bf16.msra.mxu0 0
      %395 = vmatpush.bf16.msra.mxu0 0
      %396 = vmatpush.bf16.msra.mxu0 0
      %397 = vmatpush.bf16.msra.mxu0 %v368
      %398 = vmatmul.bf16.gmra.mxu0 %v374
      %v399 = vpop.f32.mrf.mxu0
      %v400 = vadd.f32 0.0, %v399
      %v401 = vpop.f32.mrf.mxu0
      %v402 = vadd.f32 0.0, %v401
      %403 = vdwg.mxu0
      %404 = vmatpush.bf16.msra.mxu0 0
      %405 = vmatpush.bf16.msra.mxu0 0
      %406 = vmatpush.bf16.msra.mxu0 0
      %407 = vmatpush.bf16.msra.mxu0 0
      %408 = vmatpush.bf16.msra.mxu0 0
      %409 = vmatpush.bf16.msra.mxu0 0
      %410 = vmatpush.bf16.msra.mxu0 0
      %411 = vmatpush.bf16.msra.mxu0 %v365
      %412 = vmatmul.bf16.gmra.mxu0 %v374
      %v413 = vpop.f32.mrf.mxu0
      %v414 = vadd.f32 0.0, %v413
      %v415 = vpop.f32.mrf.mxu0
      %v416 = vadd.f32 0.0, %v415
      %417 = vdwg.mxu0
      %v420 = vunpack.c.l.b16 %v333
      %v421 = vunpack.c.l.b16 %v334
      %v422 = vpack.c.b16 %v421, %v420
      %v427 = vsel %vm372, %v422, 0
      %429 = vmatpush.bf16.msra.mxu0 0
      %430 = vmatpush.bf16.msra.mxu0 0
      %431 = vmatpush.bf16.msra.mxu0 0
      %432 = vmatpush.bf16.msra.mxu0 0
      %433 = vmatpush.bf16.msra.mxu0 0
      %434 = vmatpush.bf16.msra.mxu0 0
      %435 = vmatpush.bf16.msra.mxu0 0
      %436 = vmatpush.bf16.msra.mxu0 %v357
      %437 = vmatmul.bf16.gmra.mxu0 %v427
      %v438 = vpop.f32.mrf.mxu0
      %v439 = vadd.f32 %v386, %v438
      %v440 = vpop.f32.mrf.mxu0
      %v441 = vadd.f32 %v388, %v440
      %442 = vdwg.mxu0
      %443 = vmatpush.bf16.msra.mxu0 0
      %444 = vmatpush.bf16.msra.mxu0 0
      %445 = vmatpush.bf16.msra.mxu0 0
      %446 = vmatpush.bf16.msra.mxu0 0
      %447 = vmatpush.bf16.msra.mxu0 0
      %448 = vmatpush.bf16.msra.mxu0 0
      %449 = vmatpush.bf16.msra.mxu0 0
      %450 = vmatpush.bf16.msra.mxu0 %v358
      %451 = vmatmul.bf16.gmra.mxu0 %v427
      %v452 = vpop.f32.mrf.mxu0
      %v453 = vadd.f32 %v400, %v452
      %v454 = vpop.f32.mrf.mxu0
      %v455 = vadd.f32 %v402, %v454
      %456 = vdwg.mxu0
      %457 = vmatpush.bf16.msra.mxu0 0
      %458 = vmatpush.bf16.msra.mxu0 0
      %459 = vmatpush.bf16.msra.mxu0 0
      %460 = vmatpush.bf16.msra.mxu0 0
      %461 = vmatpush.bf16.msra.mxu0 0
      %462 = vmatpush.bf16.msra.mxu0 0
      %463 = vmatpush.bf16.msra.mxu0 0
      %464 = vmatpush.bf16.msra.mxu0 %v359
      %465 = vmatmul.bf16.gmra.mxu0 %v427
      %v466 = vpop.f32.mrf.mxu0
      %v467 = vadd.f32 %v414, %v466
      %v468 = vpop.f32.mrf.mxu0
      %v469 = vadd.f32 %v416, %v468
      %470 = vdwg.mxu0
      %s471 = scalar_lea.vmem %s1, 16
      %v472 = vld [vmem:[%s471] sm:$0xf]
      %v473 = vld [vmem:[%s471 + $0x4] sm:$0xf]
      %v476 = vunpack.c.l.b16 %v472
      %v477 = vunpack.c.l.b16 %v473
      %v478 = vpack.c.b16 %v477, %v476
      %479 = vrot.lane.b32.xlu0 %v357, 126
      %v480 = vpop.permute.xlu0 %479
      %481 = vrot.lane.b32.xlu0 %v358, 126
      %v482 = vpop.permute.xlu0 %481
      %483 = vrot.lane.b32.xlu0 %v359, 126
      %v484 = vpop.permute.xlu0 %483
      %vm485 = vcmask 1031168
      %v486 = vsel %vm485, %v480, %v482
      %v487 = vsel %vm485, %v482, %v484
      %v492 = vsel %vm372, %v478, 0
      %494 = vmatpush.bf16.msra.mxu0 0
      %495 = vmatpush.bf16.msra.mxu0 0
      %496 = vmatpush.bf16.msra.mxu0 0
      %497 = vmatpush.bf16.msra.mxu0 0
      %498 = vmatpush.bf16.msra.mxu0 0
      %499 = vmatpush.bf16.msra.mxu0 0
      %500 = vmatpush.bf16.msra.mxu0 0
      %501 = vmatpush.bf16.msra.mxu0 %v486
      %502 = vmatmul.bf16.gmra.mxu0 %v492
      %v503 = vpop.f32.mrf.mxu0
      %v504 = vadd.f32 0.0, %v503
      %v505 = vpop.f32.mrf.mxu0
      %v506 = vadd.f32 0.0, %v505
      %507 = vdwg.mxu0
      %508 = vmatpush.bf16.msra.mxu0 0
      %509 = vmatpush.bf16.msra.mxu0 0
      %510 = vmatpush.bf16.msra.mxu0 0
      %511 = vmatpush.bf16.msra.mxu0 0
      %512 = vmatpush.bf16.msra.mxu0 0
      %513 = vmatpush.bf16.msra.mxu0 0
      %514 = vmatpush.bf16.msra.mxu0 0
      %515 = vmatpush.bf16.msra.mxu0 %v487
      %516 = vmatmul.bf16.gmra.mxu0 %v492
      %v517 = vpop.f32.mrf.mxu0
      %v518 = vadd.f32 0.0, %v517
      %v519 = vpop.f32.mrf.mxu0
      %v520 = vadd.f32 0.0, %v519
      %521 = vdwg.mxu0
      %522 = vmatpush.bf16.msra.mxu0 0
      %523 = vmatpush.bf16.msra.mxu0 0
      %524 = vmatpush.bf16.msra.mxu0 0
      %525 = vmatpush.bf16.msra.mxu0 0
      %526 = vmatpush.bf16.msra.mxu0 0
      %527 = vmatpush.bf16.msra.mxu0 0
      %528 = vmatpush.bf16.msra.mxu0 0
      %529 = vmatpush.bf16.msra.mxu0 %v484
      %530 = vmatmul.bf16.gmra.mxu0 %v492
      %v531 = vpop.f32.mrf.mxu0
      %v532 = vadd.f32 0.0, %v531
      %v533 = vpop.f32.mrf.mxu0
      %v534 = vadd.f32 0.0, %v533
      %535 = vdwg.mxu0
      %v536 = vadd.f32 %v439, %v504
      %v537 = vadd.f32 %v453, %v518
      %v538 = vadd.f32 %v467, %v532
      %v539 = vadd.f32 %v441, %v506
      %v540 = vadd.f32 %v455, %v520
      %v541 = vadd.f32 %v469, %v534
      %s542 = scalar_lea.vmem %s1, 24
      %v543 = vld [vmem:[%s542] sm:$0xf]
      %v544 = vld [vmem:[%s542 + $0x4] sm:$0xf]
      %v547 = vunpack.c.l.b16 %v543
      %v548 = vunpack.c.l.b16 %v544
      %v549 = vpack.c.b16 %v548, %v547
      %550 = vrot.lane.b32.xlu0 %v357, 110
      %v551 = vpop.permute.xlu0 %550
      %552 = vrot.lane.b32.xlu0 %v358, 110
      %v553 = vpop.permute.xlu0 %552
      %554 = vrot.lane.b32.xlu0 %v359, 110
      %v555 = vpop.permute.xlu0 %554
      %vm556 = vcmask 900096
      %v557 = vsel %vm556, %v551, %v553
      %v558 = vsel %vm556, %v553, %v555
      %v563 = vsel %vm372, %v549, 0
      %565 = vmatpush.bf16.msra.mxu0 0
      %566 = vmatpush.bf16.msra.mxu0 0
      %567 = vmatpush.bf16.msra.mxu0 0
      %568 = vmatpush.bf16.msra.mxu0 0
      %569 = vmatpush.bf16.msra.mxu0 0
      %570 = vmatpush.bf16.msra.mxu0 0
      %571 = vmatpush.bf16.msra.mxu0 0
      %572 = vmatpush.bf16.msra.mxu0 %v557
      %573 = vmatmul.bf16.gmra.mxu0 %v563
      %v574 = vpop.f32.mrf.mxu0
      %v575 = vadd.f32 0.0, %v574
      %v576 = vpop.f32.mrf.mxu0
      %v577 = vadd.f32 0.0, %v576
      %578 = vdwg.mxu0
      %579 = vmatpush.bf16.msra.mxu0 0
      %580 = vmatpush.bf16.msra.mxu0 0
      %581 = vmatpush.bf16.msra.mxu0 0
      %582 = vmatpush.bf16.msra.mxu0 0
      %583 = vmatpush.bf16.msra.mxu0 0
      %584 = vmatpush.bf16.msra.mxu0 0
      %585 = vmatpush.bf16.msra.mxu0 0
      %586 = vmatpush.bf16.msra.mxu0 %v558
      %587 = vmatmul.bf16.gmra.mxu0 %v563
      %v588 = vpop.f32.mrf.mxu0
      %v589 = vadd.f32 0.0, %v588
      %v590 = vpop.f32.mrf.mxu0
      %v591 = vadd.f32 0.0, %v590
      %592 = vdwg.mxu0
      %593 = vmatpush.bf16.msra.mxu0 0
      %594 = vmatpush.bf16.msra.mxu0 0
      %595 = vmatpush.bf16.msra.mxu0 0
      %596 = vmatpush.bf16.msra.mxu0 0
      %597 = vmatpush.bf16.msra.mxu0 0
      %598 = vmatpush.bf16.msra.mxu0 0
      %599 = vmatpush.bf16.msra.mxu0 0
      %600 = vmatpush.bf16.msra.mxu0 %v555
      %601 = vmatmul.bf16.gmra.mxu0 %v563
      %v602 = vpop.f32.mrf.mxu0
      %v603 = vadd.f32 0.0, %v602
      %v604 = vpop.f32.mrf.mxu0
      %v605 = vadd.f32 0.0, %v604
      %606 = vdwg.mxu0
      %v607 = vadd.f32 %v536, %v575
      %v608 = vadd.f32 %v537, %v589
      %v609 = vadd.f32 %v538, %v603
      %v610 = vadd.f32 %v539, %v577
      %v611 = vadd.f32 %v540, %v591
      %v612 = vadd.f32 %v541, %v605
      %s613 = scalar_lea.vmem %s1, 32
      %v614 = vld [vmem:[%s613] sm:$0xf]
      %v615 = vld [vmem:[%s613 + $0x4] sm:$0xf]
      %v618 = vunpack.c.l.b16 %v614
      %v619 = vunpack.c.l.b16 %v615
      %v620 = vpack.c.b16 %v619, %v618
      %621 = vrot.lane.b32.xlu0 %v357, 109
      %v622 = vpop.permute.xlu0 %621
      %623 = vrot.lane.b32.xlu0 %v358, 109
      %v624 = vpop.permute.xlu0 %623
      %625 = vrot.lane.b32.xlu0 %v359, 109
      %v626 = vpop.permute.xlu0 %625
      %vm627 = vcmask 891904
      %v628 = vsel %vm627, %v622, %v624
      %v629 = vsel %vm627, %v624, %v626
      %v634 = vsel %vm372, %v620, 0
      %636 = vmatpush.bf16.msra.mxu0 0
      %637 = vmatpush.bf16.msra.mxu0 0
      %638 = vmatpush.bf16.msra.mxu0 0
      %639 = vmatpush.bf16.msra.mxu0 0
      %640 = vmatpush.bf16.msra.mxu0 0
      %641 = vmatpush.bf16.msra.mxu0 0
      %642 = vmatpush.bf16.msra.mxu0 0
      %643 = vmatpush.bf16.msra.mxu0 %v628
      %644 = vmatmul.bf16.gmra.mxu0 %v634
      %v645 = vpop.f32.mrf.mxu0
      %v646 = vadd.f32 0.0, %v645
      %v647 = vpop.f32.mrf.mxu0
      %v648 = vadd.f32 0.0, %v647
      %649 = vdwg.mxu0
      %650 = vmatpush.bf16.msra.mxu0 0
      %651 = vmatpush.bf16.msra.mxu0 0
      %652 = vmatpush.bf16.msra.mxu0 0
      %653 = vmatpush.bf16.msra.mxu0 0
      %654 = vmatpush.bf16.msra.mxu0 0
      %655 = vmatpush.bf16.msra.mxu0 0
      %656 = vmatpush.bf16.msra.mxu0 0
      %657 = vmatpush.bf16.msra.mxu0 %v629
      %658 = vmatmul.bf16.gmra.mxu0 %v634
      %v659 = vpop.f32.mrf.mxu0
      %v660 = vadd.f32 0.0, %v659
      %v661 = vpop.f32.mrf.mxu0
      %v662 = vadd.f32 0.0, %v661
      %663 = vdwg.mxu0
      %664 = vmatpush.bf16.msra.mxu0 0
      %665 = vmatpush.bf16.msra.mxu0 0
      %666 = vmatpush.bf16.msra.mxu0 0
      %667 = vmatpush.bf16.msra.mxu0 0
      %668 = vmatpush.bf16.msra.mxu0 0
      %669 = vmatpush.bf16.msra.mxu0 0
      %670 = vmatpush.bf16.msra.mxu0 0
      %671 = vmatpush.bf16.msra.mxu0 %v626
      %672 = vmatmul.bf16.gmra.mxu0 %v634
      %v673 = vpop.f32.mrf.mxu0
      %v674 = vadd.f32 0.0, %v673
      %v675 = vpop.f32.mrf.mxu0
      %v676 = vadd.f32 0.0, %v675
      %677 = vdwg.mxu0
      %v678 = vadd.f32 %v607, %v646
      %v679 = vadd.f32 %v608, %v660
      %v680 = vadd.f32 %v609, %v674
      %v681 = vadd.f32 %v610, %v648
      %v682 = vadd.f32 %v611, %v662
      %v683 = vadd.f32 %v612, %v676
      %s684 = scalar_lea.vmem %s1, 40
      %v685 = vld [vmem:[%s684] sm:$0xf]
      %v686 = vld [vmem:[%s684 + $0x4] sm:$0xf]
      %v689 = vunpack.c.l.b16 %v685
      %v690 = vunpack.c.l.b16 %v686
      %v691 = vpack.c.b16 %v690, %v689
      %692 = vrot.lane.b32.xlu0 %v357, 108
      %v693 = vpop.permute.xlu0 %692
      %694 = vrot.lane.b32.xlu0 %v358, 108
      %v695 = vpop.permute.xlu0 %694
      %696 = vrot.lane.b32.xlu0 %v359, 108
      %v697 = vpop.permute.xlu0 %696
      %vm698 = vcmask 883712
      %v699 = vsel %vm698, %v693, %v695
      %v700 = vsel %vm698, %v695, %v697
      %v705 = vsel %vm372, %v691, 0
      %707 = vmatpush.bf16.msra.mxu0 0
      %708 = vmatpush.bf16.msra.mxu0 0
      %709 = vmatpush.bf16.msra.mxu0 0
      %710 = vmatpush.bf16.msra.mxu0 0
      %711 = vmatpush.bf16.msra.mxu0 0
      %712 = vmatpush.bf16.msra.mxu0 0
      %713 = vmatpush.bf16.msra.mxu0 0
      %714 = vmatpush.bf16.msra.mxu0 %v699
      %715 = vmatmul.bf16.gmra.mxu0 %v705
      %v716 = vpop.f32.mrf.mxu0
      %v717 = vadd.f32 0.0, %v716
      %v718 = vpop.f32.mrf.mxu0
      %v719 = vadd.f32 0.0, %v718
      %720 = vdwg.mxu0
      %721 = vmatpush.bf16.msra.mxu0 0
      %722 = vmatpush.bf16.msra.mxu0 0
      %723 = vmatpush.bf16.msra.mxu0 0
      %724 = vmatpush.bf16.msra.mxu0 0
      %725 = vmatpush.bf16.msra.mxu0 0
      %726 = vmatpush.bf16.msra.mxu0 0
      %727 = vmatpush.bf16.msra.mxu0 0
      %728 = vmatpush.bf16.msra.mxu0 %v700
      %729 = vmatmul.bf16.gmra.mxu0 %v705
      %v730 = vpop.f32.mrf.mxu0
      %v731 = vadd.f32 0.0, %v730
      %v732 = vpop.f32.mrf.mxu0
      %v733 = vadd.f32 0.0, %v732
      %734 = vdwg.mxu0
      %735 = vmatpush.bf16.msra.mxu0 0
      %736 = vmatpush.bf16.msra.mxu0 0
      %737 = vmatpush.bf16.msra.mxu0 0
      %738 = vmatpush.bf16.msra.mxu0 0
      %739 = vmatpush.bf16.msra.mxu0 0
      %740 = vmatpush.bf16.msra.mxu0 0
      %741 = vmatpush.bf16.msra.mxu0 0
      %742 = vmatpush.bf16.msra.mxu0 %v697
      %743 = vmatmul.bf16.gmra.mxu0 %v705
      %v744 = vpop.f32.mrf.mxu0
      %v745 = vadd.f32 0.0, %v744
      %v746 = vpop.f32.mrf.mxu0
      %v747 = vadd.f32 0.0, %v746
      %748 = vdwg.mxu0
      %v749 = vadd.f32 %v678, %v717
      %v750 = vadd.f32 %v679, %v731
      %v751 = vadd.f32 %v680, %v745
      %v752 = vadd.f32 %v681, %v719
      %v753 = vadd.f32 %v682, %v733
      %v754 = vadd.f32 %v683, %v747
      %s755 = scalar_lea.vmem %s1, 48
      %v756 = vld [vmem:[%s755] sm:$0xf]
      %v757 = vld [vmem:[%s755 + $0x4] sm:$0xf]
      %v760 = vunpack.c.l.b16 %v756
      %v761 = vunpack.c.l.b16 %v757
      %v762 = vpack.c.b16 %v761, %v760
      %763 = vrot.lane.b32.xlu0 %v357, 92
      %v764 = vpop.permute.xlu0 %763
      %765 = vrot.lane.b32.xlu0 %v358, 92
      %v766 = vpop.permute.xlu0 %765
      %767 = vrot.lane.b32.xlu0 %v359, 92
      %v768 = vpop.permute.xlu0 %767
      %vm769 = vcmask 752640
      %v770 = vsel %vm769, %v764, %v766
      %v771 = vsel %vm769, %v766, %v768
      %v776 = vsel %vm372, %v762, 0
      %778 = vmatpush.bf16.msra.mxu0 0
      %779 = vmatpush.bf16.msra.mxu0 0
      %780 = vmatpush.bf16.msra.mxu0 0
      %781 = vmatpush.bf16.msra.mxu0 0
      %782 = vmatpush.bf16.msra.mxu0 0
      %783 = vmatpush.bf16.msra.mxu0 0
      %784 = vmatpush.bf16.msra.mxu0 0
      %785 = vmatpush.bf16.msra.mxu0 %v770
      %786 = vmatmul.bf16.gmra.mxu0 %v776
      %v787 = vpop.f32.mrf.mxu0
      %v788 = vadd.f32 0.0, %v787
      %v789 = vpop.f32.mrf.mxu0
      %v790 = vadd.f32 0.0, %v789
      %791 = vdwg.mxu0
      %792 = vmatpush.bf16.msra.mxu0 0
      %793 = vmatpush.bf16.msra.mxu0 0
      %794 = vmatpush.bf16.msra.mxu0 0
      %795 = vmatpush.bf16.msra.mxu0 0
      %796 = vmatpush.bf16.msra.mxu0 0
      %797 = vmatpush.bf16.msra.mxu0 0
      %798 = vmatpush.bf16.msra.mxu0 0
      %799 = vmatpush.bf16.msra.mxu0 %v771
      %800 = vmatmul.bf16.gmra.mxu0 %v776
      %v801 = vpop.f32.mrf.mxu0
      %v802 = vadd.f32 0.0, %v801
      %v803 = vpop.f32.mrf.mxu0
      %v804 = vadd.f32 0.0, %v803
      %805 = vdwg.mxu0
      %806 = vmatpush.bf16.msra.mxu0 0
      %807 = vmatpush.bf16.msra.mxu0 0
      %808 = vmatpush.bf16.msra.mxu0 0
      %809 = vmatpush.bf16.msra.mxu0 0
      %810 = vmatpush.bf16.msra.mxu0 0
      %811 = vmatpush.bf16.msra.mxu0 0
      %812 = vmatpush.bf16.msra.mxu0 0
      %813 = vmatpush.bf16.msra.mxu0 %v768
      %814 = vmatmul.bf16.gmra.mxu0 %v776
      %v815 = vpop.f32.mrf.mxu0
      %v816 = vadd.f32 0.0, %v815
      %v817 = vpop.f32.mrf.mxu0
      %v818 = vadd.f32 0.0, %v817
      %819 = vdwg.mxu0
      %v820 = vadd.f32 %v749, %v788
      %v821 = vadd.f32 %v750, %v802
      %v822 = vadd.f32 %v751, %v816
      %v823 = vadd.f32 %v752, %v790
      %v824 = vadd.f32 %v753, %v804
      %v825 = vadd.f32 %v754, %v818
      %s826 = scalar_lea.vmem %s1, 56
      %v827 = vld [vmem:[%s826] sm:$0xf]
      %v828 = vld [vmem:[%s826 + $0x4] sm:$0xf]
      %v831 = vunpack.c.l.b16 %v827
      %v832 = vunpack.c.l.b16 %v828
      %v833 = vpack.c.b16 %v832, %v831
      %834 = vrot.lane.b32.xlu0 %v357, 91
      %v835 = vpop.permute.xlu0 %834
      %836 = vrot.lane.b32.xlu0 %v358, 91
      %v837 = vpop.permute.xlu0 %836
      %838 = vrot.lane.b32.xlu0 %v359, 91
      %v839 = vpop.permute.xlu0 %838
      %vm840 = vcmask 744448
      %v841 = vsel %vm840, %v835, %v837
      %v842 = vsel %vm840, %v837, %v839
      %v847 = vsel %vm372, %v833, 0
      %849 = vmatpush.bf16.msra.mxu0 0
      %850 = vmatpush.bf16.msra.mxu0 0
      %851 = vmatpush.bf16.msra.mxu0 0
      %852 = vmatpush.bf16.msra.mxu0 0
      %853 = vmatpush.bf16.msra.mxu0 0
      %854 = vmatpush.bf16.msra.mxu0 0
      %855 = vmatpush.bf16.msra.mxu0 0
      %856 = vmatpush.bf16.msra.mxu0 %v841
      %857 = vmatmul.bf16.gmra.mxu0 %v847
      %v858 = vpop.f32.mrf.mxu0
      %v859 = vadd.f32 0.0, %v858
      %v860 = vpop.f32.mrf.mxu0
      %v861 = vadd.f32 0.0, %v860
      %862 = vdwg.mxu0
      %863 = vmatpush.bf16.msra.mxu0 0
      %864 = vmatpush.bf16.msra.mxu0 0
      %865 = vmatpush.bf16.msra.mxu0 0
      %866 = vmatpush.bf16.msra.mxu0 0
      %867 = vmatpush.bf16.msra.mxu0 0
      %868 = vmatpush.bf16.msra.mxu0 0
      %869 = vmatpush.bf16.msra.mxu0 0
      %870 = vmatpush.bf16.msra.mxu0 %v842
      %871 = vmatmul.bf16.gmra.mxu0 %v847
      %v872 = vpop.f32.mrf.mxu0
      %v873 = vadd.f32 0.0, %v872
      %v874 = vpop.f32.mrf.mxu0
      %v875 = vadd.f32 0.0, %v874
      %876 = vdwg.mxu0
      %877 = vmatpush.bf16.msra.mxu0 0
      %878 = vmatpush.bf16.msra.mxu0 0
      %879 = vmatpush.bf16.msra.mxu0 0
      %880 = vmatpush.bf16.msra.mxu0 0
      %881 = vmatpush.bf16.msra.mxu0 0
      %882 = vmatpush.bf16.msra.mxu0 0
      %883 = vmatpush.bf16.msra.mxu0 0
      %884 = vmatpush.bf16.msra.mxu0 %v839
      %885 = vmatmul.bf16.gmra.mxu0 %v847
      %v886 = vpop.f32.mrf.mxu0
      %v887 = vadd.f32 0.0, %v886
      %v888 = vpop.f32.mrf.mxu0
      %v889 = vadd.f32 0.0, %v888
      %890 = vdwg.mxu0
      %v891 = vadd.f32 %v820, %v859
      %v892 = vadd.f32 %v821, %v873
      %v893 = vadd.f32 %v822, %v887
      %v894 = vadd.f32 %v823, %v861
      %v895 = vadd.f32 %v824, %v875
      %v896 = vadd.f32 %v825, %v889
      %s897 = scalar_lea.vmem %s1, 64
      %v898 = vld [vmem:[%s897] sm:$0xf]
      %v899 = vld [vmem:[%s897 + $0x4] sm:$0xf]
      %v902 = vunpack.c.l.b16 %v898
      %v903 = vunpack.c.l.b16 %v899
      %v904 = vpack.c.b16 %v903, %v902
      %905 = vrot.lane.b32.xlu0 %v357, 90
      %v906 = vpop.permute.xlu0 %905
      %907 = vrot.lane.b32.xlu0 %v358, 90
      %v908 = vpop.permute.xlu0 %907
      %909 = vrot.lane.b32.xlu0 %v359, 90
      %v910 = vpop.permute.xlu0 %909
      %vm911 = vcmask 736256
      %v912 = vsel %vm911, %v906, %v908
      %v913 = vsel %vm911, %v908, %v910
      %v918 = vsel %vm372, %v904, 0
      %920 = vmatpush.bf16.msra.mxu0 0
      %921 = vmatpush.bf16.msra.mxu0 0
      %922 = vmatpush.bf16.msra.mxu0 0
      %923 = vmatpush.bf16.msra.mxu0 0
      %924 = vmatpush.bf16.msra.mxu0 0
      %925 = vmatpush.bf16.msra.mxu0 0
      %926 = vmatpush.bf16.msra.mxu0 0
      %927 = vmatpush.bf16.msra.mxu0 %v912
      %928 = vmatmul.bf16.gmra.mxu0 %v918
      %v929 = vpop.f32.mrf.mxu0
      %v930 = vadd.f32 0.0, %v929
      %v931 = vpop.f32.mrf.mxu0
      %v932 = vadd.f32 0.0, %v931
      %933 = vdwg.mxu0
      %934 = vmatpush.bf16.msra.mxu0 0
      %935 = vmatpush.bf16.msra.mxu0 0
      %936 = vmatpush.bf16.msra.mxu0 0
      %937 = vmatpush.bf16.msra.mxu0 0
      %938 = vmatpush.bf16.msra.mxu0 0
      %939 = vmatpush.bf16.msra.mxu0 0
      %940 = vmatpush.bf16.msra.mxu0 0
      %941 = vmatpush.bf16.msra.mxu0 %v913
      %942 = vmatmul.bf16.gmra.mxu0 %v918
      %v943 = vpop.f32.mrf.mxu0
      %v944 = vadd.f32 0.0, %v943
      %v945 = vpop.f32.mrf.mxu0
      %v946 = vadd.f32 0.0, %v945
      %947 = vdwg.mxu0
      %948 = vmatpush.bf16.msra.mxu0 0
      %949 = vmatpush.bf16.msra.mxu0 0
      %950 = vmatpush.bf16.msra.mxu0 0
      %951 = vmatpush.bf16.msra.mxu0 0
      %952 = vmatpush.bf16.msra.mxu0 0
      %953 = vmatpush.bf16.msra.mxu0 0
      %954 = vmatpush.bf16.msra.mxu0 0
      %955 = vmatpush.bf16.msra.mxu0 %v910
      %956 = vmatmul.bf16.gmra.mxu0 %v918
      %v957 = vpop.f32.mrf.mxu0
      %v958 = vadd.f32 0.0, %v957
      %v959 = vpop.f32.mrf.mxu0
      %v960 = vadd.f32 0.0, %v959
      %961 = vdwg.mxu0
      %v962 = vadd.f32 %v891, %v930
      %v963 = vadd.f32 %v892, %v944
      %v964 = vadd.f32 %v893, %v958
      %v965 = vadd.f32 %v894, %v932
      %v966 = vadd.f32 %v895, %v946
      %v967 = vadd.f32 %v896, %v960
      %v968 = vld [vmem:[%s2] sm:$0xff]
      %v969 = vld [vmem:[%s2 + $0x8] sm:$0xff]
      %971 = vset.pattern.permute.xlu0 0
      %972 = vperm.xlu0 %971, %v968
      %v973 = vpop.permute.xlu0 %972
      %976 = vset.pattern.permute.xlu0 0
      %977 = vperm.xlu0 %976, %v969
      %v978 = vpop.permute.xlu0 %977
      %v980 = vadd.f32 %v962, %v973
      %v981 = vadd.f32 %v963, %v973
      %v982 = vadd.f32 %v964, %v973
      %v983 = vadd.f32 %v965, %v978
      %v984 = vadd.f32 %v966, %v978
      %v985 = vadd.f32 %v967, %v978
      %v986 = vmax.f32 %v980, 0.0
      %v987 = vmax.f32 %v981, 0.0
      %v988 = vmax.f32 %v982, 0.0
      %v989 = vmax.f32 %v983, 0.0
      %v990 = vmax.f32 %v984, 0.0
      %v991 = vmax.f32 %v985, 0.0
      %v993 = vperm.slane %v332, 0
      %v994 = vperm.slane %v332, 1
      %v995 = vperm.slane %v332, 2
      %v999 = vmul.f32 %v986, %v993
      %v1000 = vmul.f32 %v987, %v994
      %v1001 = vmul.f32 %v988, %v995
      %v1002 = vmul.f32 %v989, %v993
      %v1003 = vmul.f32 %v990, %v994
      %v1004 = vmul.f32 %v991, %v995
      %v1005 = vpack.c.bf16 %v1000, %v999
      %v1006 = vpack.c.bf16 %v1001, %v1001
      %v1007 = vpack.c.bf16 %v1003, %v1002
      %v1008 = vpack.c.bf16 %v1004, %v1004
      %1009 = vst [vmem:[#allocation2] sm:$0xff] 0
      %1010 = vst [vmem:[#allocation2 + $0x8] sm:$0xf] 0
      %1011 = vst [vmem:[#allocation2 + $0xc] sm:$0xff] 0
      %1012 = vst [vmem:[#allocation2 + $0x14] sm:$0xf] 0
      %1017 = vrot.lane.b32.xlu0 %v1005, 19
      %v1018 = vpop.permute.xlu0 %1017
      %1019 = vrot.lane.b32.xlu0 %v1006, 19
      %v1020 = vpop.permute.xlu0 %1019
      %1021 = vrot.lane.b32.xlu0 %v1007, 19
      %v1022 = vpop.permute.xlu0 %1021
      %1023 = vrot.lane.b32.xlu0 %v1008, 19
      %v1024 = vpop.permute.xlu0 %1023
      %v1025 = vrot.slane %v1018, 4
      %v1026 = vrot.slane %v1022, 4
      %vm1027 = vcmask 154624
      %v1028 = vsel %vm1027, %v1025, %v1018
      %v1029 = vsel %vm1027, %v1025, %v1020
      %v1030 = vsel %vm1027, %v1026, %v1022
      %v1031 = vsel %vm1027, %v1026, %v1024
      %vm1036 = vcmask 1043608
      %vm1037 = vcmask 1047556
      %vm1038 = vmor %vm1037, %vm1036
      %1039 = vst.msk [vmem:[#allocation2] sm:$0xff] %vm1038, %v1028
      %vm1040 = vcmask 412672
      %1041 = vst.msk [vmem:[#allocation2 + $0x8] sm:$0xf] %vm1040, %v1029
      %1042 = vst.msk [vmem:[#allocation2 + $0xc] sm:$0xff] %vm1038, %v1030
      %1043 = vst.msk [vmem:[#allocation2 + $0x14] sm:$0xf] %vm1040, %v1031
      %v1044 = vld [vmem:[%s3] sm:$0xf]
      %v1045 = vld [vmem:[%s3 + $0x4] sm:$0xf]
      %v1046 = vld [vmem:[#allocation2] sm:$0xff]
      %v1047 = vld [vmem:[#allocation2 + $0x8] sm:$0xf]
      %v1048 = vld [vmem:[#allocation2 + $0xc] sm:$0xff]
      %v1049 = vld [vmem:[#allocation2 + $0x14] sm:$0xf]
      %s1050 = scalar_lea.vmem %s3, 8
      %v1051 = vld [vmem:[%s1050] sm:$0xf]
      %v1052 = vld [vmem:[%s1050 + $0x4] sm:$0xf]
      %v1055 = vunpack.c.l.b16 %v1051
      %v1056 = vunpack.c.l.b16 %v1052
      %v1057 = vpack.c.b16 %v1056, %v1055
      %v1062 = vunpack.c.l.b16 %v1046
      %v1063 = vunpack.c.h.b16 %v1046
      %v1064 = vunpack.c.l.b16 %v1047
      %v1065 = vunpack.c.l.b16 %v1048
      %v1066 = vunpack.c.h.b16 %v1048
      %v1067 = vunpack.c.l.b16 %v1049
      %v1068 = vpack.c.b16 %v1065, %v1062
      %v1069 = vpack.c.b16 %v1066, %v1063
      %v1070 = vpack.c.b16 %v1067, %v1064
      %1071 = vrot.lane.b32.xlu0 %v1068, 127
      %v1072 = vpop.permute.xlu0 %1071
      %1073 = vrot.lane.b32.xlu0 %v1069, 127
      %v1074 = vpop.permute.xlu0 %1073
      %1075 = vrot.lane.b32.xlu0 %v1070, 127
      %v1076 = vpop.permute.xlu0 %1075
      %v1077 = vsel %vm366, %v1072, %v1074
      %v1078 = vsel %vm366, %v1074, %v1076
      %v1083 = vsel %vm372, %v1057, 0
      %1085 = vmatpush.bf16.msra.mxu0 0
      %1086 = vmatpush.bf16.msra.mxu0 0
      %1087 = vmatpush.bf16.msra.mxu0 0
      %1088 = vmatpush.bf16.msra.mxu0 0
      %1089 = vmatpush.bf16.msra.mxu0 0
      %1090 = vmatpush.bf16.msra.mxu0 0
      %1091 = vmatpush.bf16.msra.mxu0 0
      %1092 = vmatpush.bf16.msra.mxu0 %v1077
      %1093 = vmatmul.bf16.gmra.mxu0 %v1083
      %v1094 = vpop.f32.mrf.mxu0
      %v1095 = vadd.f32 0.0, %v1094
      %v1096 = vpop.f32.mrf.mxu0
      %v1097 = vadd.f32 0.0, %v1096
      %1098 = vdwg.mxu0
      %1099 = vmatpush.bf16.msra.mxu0 0
      %1100 = vmatpush.bf16.msra.mxu0 0
      %1101 = vmatpush.bf16.msra.mxu0 0
      %1102 = vmatpush.bf16.msra.mxu0 0
      %1103 = vmatpush.bf16.msra.mxu0 0
      %1104 = vmatpush.bf16.msra.mxu0 0
      %1105 = vmatpush.bf16.msra.mxu0 0
      %1106 = vmatpush.bf16.msra.mxu0 %v1078
      %1107 = vmatmul.bf16.gmra.mxu0 %v1083
      %v1108 = vpop.f32.mrf.mxu0
      %v1109 = vadd.f32 0.0, %v1108
      %v1110 = vpop.f32.mrf.mxu0
      %v1111 = vadd.f32 0.0, %v1110
      %1112 = vdwg.mxu0
      %1113 = vmatpush.bf16.msra.mxu0 0
      %1114 = vmatpush.bf16.msra.mxu0 0
      %1115 = vmatpush.bf16.msra.mxu0 0
      %1116 = vmatpush.bf16.msra.mxu0 0
      %1117 = vmatpush.bf16.msra.mxu0 0
      %1118 = vmatpush.bf16.msra.mxu0 0
      %1119 = vmatpush.bf16.msra.mxu0 0
      %1120 = vmatpush.bf16.msra.mxu0 %v1076
      %1121 = vmatmul.bf16.gmra.mxu0 %v1083
      %v1122 = vpop.f32.mrf.mxu0
      %v1123 = vadd.f32 0.0, %v1122
      %v1124 = vpop.f32.mrf.mxu0
      %v1125 = vadd.f32 0.0, %v1124
      %1126 = vdwg.mxu0
      %v1129 = vunpack.c.l.b16 %v1044
      %v1130 = vunpack.c.l.b16 %v1045
      %v1131 = vpack.c.b16 %v1130, %v1129
      %v1136 = vsel %vm372, %v1131, 0
      %1138 = vmatpush.bf16.msra.mxu0 0
      %1139 = vmatpush.bf16.msra.mxu0 0
      %1140 = vmatpush.bf16.msra.mxu0 0
      %1141 = vmatpush.bf16.msra.mxu0 0
      %1142 = vmatpush.bf16.msra.mxu0 0
      %1143 = vmatpush.bf16.msra.mxu0 0
      %1144 = vmatpush.bf16.msra.mxu0 0
      %1145 = vmatpush.bf16.msra.mxu0 %v1068
      %1146 = vmatmul.bf16.gmra.mxu0 %v1136
      %v1147 = vpop.f32.mrf.mxu0
      %v1148 = vadd.f32 %v1095, %v1147
      %v1149 = vpop.f32.mrf.mxu0
      %v1150 = vadd.f32 %v1097, %v1149
      %1151 = vdwg.mxu0
      %1152 = vmatpush.bf16.msra.mxu0 0
      %1153 = vmatpush.bf16.msra.mxu0 0
      %1154 = vmatpush.bf16.msra.mxu0 0
      %1155 = vmatpush.bf16.msra.mxu0 0
      %1156 = vmatpush.bf16.msra.mxu0 0
      %1157 = vmatpush.bf16.msra.mxu0 0
      %1158 = vmatpush.bf16.msra.mxu0 0
      %1159 = vmatpush.bf16.msra.mxu0 %v1069
      %1160 = vmatmul.bf16.gmra.mxu0 %v1136
      %v1161 = vpop.f32.mrf.mxu0
      %v1162 = vadd.f32 %v1109, %v1161
      %v1163 = vpop.f32.mrf.mxu0
      %v1164 = vadd.f32 %v1111, %v1163
      %1165 = vdwg.mxu0
      %1166 = vmatpush.bf16.msra.mxu0 0
      %1167 = vmatpush.bf16.msra.mxu0 0
      %1168 = vmatpush.bf16.msra.mxu0 0
      %1169 = vmatpush.bf16.msra.mxu0 0
      %1170 = vmatpush.bf16.msra.mxu0 0
      %1171 = vmatpush.bf16.msra.mxu0 0
      %1172 = vmatpush.bf16.msra.mxu0 0
      %1173 = vmatpush.bf16.msra.mxu0 %v1070
      %1174 = vmatmul.bf16.gmra.mxu0 %v1136
      %v1175 = vpop.f32.mrf.mxu0
      %v1176 = vadd.f32 %v1123, %v1175
      %v1177 = vpop.f32.mrf.mxu0
      %v1178 = vadd.f32 %v1125, %v1177
      %1179 = vdwg.mxu0
      %s1180 = scalar_lea.vmem %s3, 16
      %v1181 = vld [vmem:[%s1180] sm:$0xf]
      %v1182 = vld [vmem:[%s1180 + $0x4] sm:$0xf]
      %v1185 = vunpack.c.l.b16 %v1181
      %v1186 = vunpack.c.l.b16 %v1182
      %v1187 = vpack.c.b16 %v1186, %v1185
      %1188 = vrot.lane.b32.xlu0 %v1068, 126
      %v1189 = vpop.permute.xlu0 %1188
      %1190 = vrot.lane.b32.xlu0 %v1069, 126
      %v1191 = vpop.permute.xlu0 %1190
      %1192 = vrot.lane.b32.xlu0 %v1070, 126
      %v1193 = vpop.permute.xlu0 %1192
      %v1194 = vsel %vm485, %v1189, %v1191
      %v1195 = vsel %vm485, %v1191, %v1193
      %v1200 = vsel %vm372, %v1187, 0
      %1202 = vmatpush.bf16.msra.mxu0 0
      %1203 = vmatpush.bf16.msra.mxu0 0
      %1204 = vmatpush.bf16.msra.mxu0 0
      %1205 = vmatpush.bf16.msra.mxu0 0
      %1206 = vmatpush.bf16.msra.mxu0 0
      %1207 = vmatpush.bf16.msra.mxu0 0
      %1208 = vmatpush.bf16.msra.mxu0 0
      %1209 = vmatpush.bf16.msra.mxu0 %v1194
      %1210 = vmatmul.bf16.gmra.mxu0 %v1200
      %v1211 = vpop.f32.mrf.mxu0
      %v1212 = vadd.f32 0.0, %v1211
      %v1213 = vpop.f32.mrf.mxu0
      %v1214 = vadd.f32 0.0, %v1213
      %1215 = vdwg.mxu0
      %1216 = vmatpush.bf16.msra.mxu0 0
      %1217 = vmatpush.bf16.msra.mxu0 0
      %1218 = vmatpush.bf16.msra.mxu0 0
      %1219 = vmatpush.bf16.msra.mxu0 0
      %1220 = vmatpush.bf16.msra.mxu0 0
      %1221 = vmatpush.bf16.msra.mxu0 0
      %1222 = vmatpush.bf16.msra.mxu0 0
      %1223 = vmatpush.bf16.msra.mxu0 %v1195
      %1224 = vmatmul.bf16.gmra.mxu0 %v1200
      %v1225 = vpop.f32.mrf.mxu0
      %v1226 = vadd.f32 0.0, %v1225
      %v1227 = vpop.f32.mrf.mxu0
      %v1228 = vadd.f32 0.0, %v1227
      %1229 = vdwg.mxu0
      %1230 = vmatpush.bf16.msra.mxu0 0
      %1231 = vmatpush.bf16.msra.mxu0 0
      %1232 = vmatpush.bf16.msra.mxu0 0
      %1233 = vmatpush.bf16.msra.mxu0 0
      %1234 = vmatpush.bf16.msra.mxu0 0
      %1235 = vmatpush.bf16.msra.mxu0 0
      %1236 = vmatpush.bf16.msra.mxu0 0
      %1237 = vmatpush.bf16.msra.mxu0 %v1193
      %1238 = vmatmul.bf16.gmra.mxu0 %v1200
      %v1239 = vpop.f32.mrf.mxu0
      %v1240 = vadd.f32 0.0, %v1239
      %v1241 = vpop.f32.mrf.mxu0
      %v1242 = vadd.f32 0.0, %v1241
      %1243 = vdwg.mxu0
      %v1244 = vadd.f32 %v1148, %v1212
      %v1245 = vadd.f32 %v1162, %v1226
      %v1246 = vadd.f32 %v1176, %v1240
      %v1247 = vadd.f32 %v1150, %v1214
      %v1248 = vadd.f32 %v1164, %v1228
      %v1249 = vadd.f32 %v1178, %v1242
      %s1250 = scalar_lea.vmem %s3, 24
      %v1251 = vld [vmem:[%s1250] sm:$0xf]
      %v1252 = vld [vmem:[%s1250 + $0x4] sm:$0xf]
      %v1255 = vunpack.c.l.b16 %v1251
      %v1256 = vunpack.c.l.b16 %v1252
      %v1257 = vpack.c.b16 %v1256, %v1255
      %1258 = vrot.lane.b32.xlu0 %v1068, 110
      %v1259 = vpop.permute.xlu0 %1258
      %1260 = vrot.lane.b32.xlu0 %v1069, 110
      %v1261 = vpop.permute.xlu0 %1260
      %1262 = vrot.lane.b32.xlu0 %v1070, 110
      %v1263 = vpop.permute.xlu0 %1262
      %v1264 = vsel %vm556, %v1259, %v1261
      %v1265 = vsel %vm556, %v1261, %v1263
      %v1270 = vsel %vm372, %v1257, 0
      %1272 = vmatpush.bf16.msra.mxu0 0
      %1273 = vmatpush.bf16.msra.mxu0 0
      %1274 = vmatpush.bf16.msra.mxu0 0
      %1275 = vmatpush.bf16.msra.mxu0 0
      %1276 = vmatpush.bf16.msra.mxu0 0
      %1277 = vmatpush.bf16.msra.mxu0 0
      %1278 = vmatpush.bf16.msra.mxu0 0
      %1279 = vmatpush.bf16.msra.mxu0 %v1264
      %1280 = vmatmul.bf16.gmra.mxu0 %v1270
      %v1281 = vpop.f32.mrf.mxu0
      %v1282 = vadd.f32 0.0, %v1281
      %v1283 = vpop.f32.mrf.mxu0
      %v1284 = vadd.f32 0.0, %v1283
      %1285 = vdwg.mxu0
      %1286 = vmatpush.bf16.msra.mxu0 0
      %1287 = vmatpush.bf16.msra.mxu0 0
      %1288 = vmatpush.bf16.msra.mxu0 0
      %1289 = vmatpush.bf16.msra.mxu0 0
      %1290 = vmatpush.bf16.msra.mxu0 0
      %1291 = vmatpush.bf16.msra.mxu0 0
      %1292 = vmatpush.bf16.msra.mxu0 0
      %1293 = vmatpush.bf16.msra.mxu0 %v1265
      %1294 = vmatmul.bf16.gmra.mxu0 %v1270
      %v1295 = vpop.f32.mrf.mxu0
      %v1296 = vadd.f32 0.0, %v1295
      %v1297 = vpop.f32.mrf.mxu0
      %v1298 = vadd.f32 0.0, %v1297
      %1299 = vdwg.mxu0
      %1300 = vmatpush.bf16.msra.mxu0 0
      %1301 = vmatpush.bf16.msra.mxu0 0
      %1302 = vmatpush.bf16.msra.mxu0 0
      %1303 = vmatpush.bf16.msra.mxu0 0
      %1304 = vmatpush.bf16.msra.mxu0 0
      %1305 = vmatpush.bf16.msra.mxu0 0
      %1306 = vmatpush.bf16.msra.mxu0 0
      %1307 = vmatpush.bf16.msra.mxu0 %v1263
      %1308 = vmatmul.bf16.gmra.mxu0 %v1270
      %v1309 = vpop.f32.mrf.mxu0
      %v1310 = vadd.f32 0.0, %v1309
      %v1311 = vpop.f32.mrf.mxu0
      %v1312 = vadd.f32 0.0, %v1311
      %1313 = vdwg.mxu0
      %v1314 = vadd.f32 %v1244, %v1282
      %v1315 = vadd.f32 %v1245, %v1296
      %v1316 = vadd.f32 %v1246, %v1310
      %v1317 = vadd.f32 %v1247, %v1284
      %v1318 = vadd.f32 %v1248, %v1298
      %v1319 = vadd.f32 %v1249, %v1312
      %s1320 = scalar_lea.vmem %s3, 32
      %v1321 = vld [vmem:[%s1320] sm:$0xf]
      %v1322 = vld [vmem:[%s1320 + $0x4] sm:$0xf]
      %v1325 = vunpack.c.l.b16 %v1321
      %v1326 = vunpack.c.l.b16 %v1322
      %v1327 = vpack.c.b16 %v1326, %v1325
      %1328 = vrot.lane.b32.xlu0 %v1068, 109
      %v1329 = vpop.permute.xlu0 %1328
      %1330 = vrot.lane.b32.xlu0 %v1069, 109
      %v1331 = vpop.permute.xlu0 %1330
      %1332 = vrot.lane.b32.xlu0 %v1070, 109
      %v1333 = vpop.permute.xlu0 %1332
      %v1334 = vsel %vm627, %v1329, %v1331
      %v1335 = vsel %vm627, %v1331, %v1333
      %v1340 = vsel %vm372, %v1327, 0
      %1342 = vmatpush.bf16.msra.mxu0 0
      %1343 = vmatpush.bf16.msra.mxu0 0
      %1344 = vmatpush.bf16.msra.mxu0 0
      %1345 = vmatpush.bf16.msra.mxu0 0
      %1346 = vmatpush.bf16.msra.mxu0 0
      %1347 = vmatpush.bf16.msra.mxu0 0
      %1348 = vmatpush.bf16.msra.mxu0 0
      %1349 = vmatpush.bf16.msra.mxu0 %v1334
      %1350 = vmatmul.bf16.gmra.mxu0 %v1340
      %v1351 = vpop.f32.mrf.mxu0
      %v1352 = vadd.f32 0.0, %v1351
      %v1353 = vpop.f32.mrf.mxu0
      %v1354 = vadd.f32 0.0, %v1353
      %1355 = vdwg.mxu0
      %1356 = vmatpush.bf16.msra.mxu0 0
      %1357 = vmatpush.bf16.msra.mxu0 0
      %1358 = vmatpush.bf16.msra.mxu0 0
      %1359 = vmatpush.bf16.msra.mxu0 0
      %1360 = vmatpush.bf16.msra.mxu0 0
      %1361 = vmatpush.bf16.msra.mxu0 0
      %1362 = vmatpush.bf16.msra.mxu0 0
      %1363 = vmatpush.bf16.msra.mxu0 %v1335
      %1364 = vmatmul.bf16.gmra.mxu0 %v1340
      %v1365 = vpop.f32.mrf.mxu0
      %v1366 = vadd.f32 0.0, %v1365
      %v1367 = vpop.f32.mrf.mxu0
      %v1368 = vadd.f32 0.0, %v1367
      %1369 = vdwg.mxu0
      %1370 = vmatpush.bf16.msra.mxu0 0
      %1371 = vmatpush.bf16.msra.mxu0 0
      %1372 = vmatpush.bf16.msra.mxu0 0
      %1373 = vmatpush.bf16.msra.mxu0 0
      %1374 = vmatpush.bf16.msra.mxu0 0
      %1375 = vmatpush.bf16.msra.mxu0 0
      %1376 = vmatpush.bf16.msra.mxu0 0
      %1377 = vmatpush.bf16.msra.mxu0 %v1333
      %1378 = vmatmul.bf16.gmra.mxu0 %v1340
      %v1379 = vpop.f32.mrf.mxu0
      %v1380 = vadd.f32 0.0, %v1379
      %v1381 = vpop.f32.mrf.mxu0
      %v1382 = vadd.f32 0.0, %v1381
      %1383 = vdwg.mxu0
      %v1384 = vadd.f32 %v1314, %v1352
      %v1385 = vadd.f32 %v1315, %v1366
      %v1386 = vadd.f32 %v1316, %v1380
      %v1387 = vadd.f32 %v1317, %v1354
      %v1388 = vadd.f32 %v1318, %v1368
      %v1389 = vadd.f32 %v1319, %v1382
      %s1390 = scalar_lea.vmem %s3, 40
      %v1391 = vld [vmem:[%s1390] sm:$0xf]
      %v1392 = vld [vmem:[%s1390 + $0x4] sm:$0xf]
      %v1395 = vunpack.c.l.b16 %v1391
      %v1396 = vunpack.c.l.b16 %v1392
      %v1397 = vpack.c.b16 %v1396, %v1395
      %1398 = vrot.lane.b32.xlu0 %v1068, 108
      %v1399 = vpop.permute.xlu0 %1398
      %1400 = vrot.lane.b32.xlu0 %v1069, 108
      %v1401 = vpop.permute.xlu0 %1400
      %1402 = vrot.lane.b32.xlu0 %v1070, 108
      %v1403 = vpop.permute.xlu0 %1402
      %v1404 = vsel %vm698, %v1399, %v1401
      %v1405 = vsel %vm698, %v1401, %v1403
      %v1410 = vsel %vm372, %v1397, 0
      %1412 = vmatpush.bf16.msra.mxu0 0
      %1413 = vmatpush.bf16.msra.mxu0 0
      %1414 = vmatpush.bf16.msra.mxu0 0
      %1415 = vmatpush.bf16.msra.mxu0 0
      %1416 = vmatpush.bf16.msra.mxu0 0
      %1417 = vmatpush.bf16.msra.mxu0 0
      %1418 = vmatpush.bf16.msra.mxu0 0
      %1419 = vmatpush.bf16.msra.mxu0 %v1404
      %1420 = vmatmul.bf16.gmra.mxu0 %v1410
      %v1421 = vpop.f32.mrf.mxu0
      %v1422 = vadd.f32 0.0, %v1421
      %v1423 = vpop.f32.mrf.mxu0
      %v1424 = vadd.f32 0.0, %v1423
      %1425 = vdwg.mxu0
      %1426 = vmatpush.bf16.msra.mxu0 0
      %1427 = vmatpush.bf16.msra.mxu0 0
      %1428 = vmatpush.bf16.msra.mxu0 0
      %1429 = vmatpush.bf16.msra.mxu0 0
      %1430 = vmatpush.bf16.msra.mxu0 0
      %1431 = vmatpush.bf16.msra.mxu0 0
      %1432 = vmatpush.bf16.msra.mxu0 0
      %1433 = vmatpush.bf16.msra.mxu0 %v1405
      %1434 = vmatmul.bf16.gmra.mxu0 %v1410
      %v1435 = vpop.f32.mrf.mxu0
      %v1436 = vadd.f32 0.0, %v1435
      %v1437 = vpop.f32.mrf.mxu0
      %v1438 = vadd.f32 0.0, %v1437
      %1439 = vdwg.mxu0
      %1440 = vmatpush.bf16.msra.mxu0 0
      %1441 = vmatpush.bf16.msra.mxu0 0
      %1442 = vmatpush.bf16.msra.mxu0 0
      %1443 = vmatpush.bf16.msra.mxu0 0
      %1444 = vmatpush.bf16.msra.mxu0 0
      %1445 = vmatpush.bf16.msra.mxu0 0
      %1446 = vmatpush.bf16.msra.mxu0 0
      %1447 = vmatpush.bf16.msra.mxu0 %v1403
      %1448 = vmatmul.bf16.gmra.mxu0 %v1410
      %v1449 = vpop.f32.mrf.mxu0
      %v1450 = vadd.f32 0.0, %v1449
      %v1451 = vpop.f32.mrf.mxu0
      %v1452 = vadd.f32 0.0, %v1451
      %1453 = vdwg.mxu0
      %v1454 = vadd.f32 %v1384, %v1422
      %v1455 = vadd.f32 %v1385, %v1436
      %v1456 = vadd.f32 %v1386, %v1450
      %v1457 = vadd.f32 %v1387, %v1424
      %v1458 = vadd.f32 %v1388, %v1438
      %v1459 = vadd.f32 %v1389, %v1452
      %s1460 = scalar_lea.vmem %s3, 48
      %v1461 = vld [vmem:[%s1460] sm:$0xf]
      %v1462 = vld [vmem:[%s1460 + $0x4] sm:$0xf]
      %v1465 = vunpack.c.l.b16 %v1461
      %v1466 = vunpack.c.l.b16 %v1462
      %v1467 = vpack.c.b16 %v1466, %v1465
      %1468 = vrot.lane.b32.xlu0 %v1068, 92
      %v1469 = vpop.permute.xlu0 %1468
      %1470 = vrot.lane.b32.xlu0 %v1069, 92
      %v1471 = vpop.permute.xlu0 %1470
      %1472 = vrot.lane.b32.xlu0 %v1070, 92
      %v1473 = vpop.permute.xlu0 %1472
      %v1474 = vsel %vm769, %v1469, %v1471
      %v1475 = vsel %vm769, %v1471, %v1473
      %v1480 = vsel %vm372, %v1467, 0
      %1482 = vmatpush.bf16.msra.mxu0 0
      %1483 = vmatpush.bf16.msra.mxu0 0
      %1484 = vmatpush.bf16.msra.mxu0 0
      %1485 = vmatpush.bf16.msra.mxu0 0
      %1486 = vmatpush.bf16.msra.mxu0 0
      %1487 = vmatpush.bf16.msra.mxu0 0
      %1488 = vmatpush.bf16.msra.mxu0 0
      %1489 = vmatpush.bf16.msra.mxu0 %v1474
      %1490 = vmatmul.bf16.gmra.mxu0 %v1480
      %v1491 = vpop.f32.mrf.mxu0
      %v1492 = vadd.f32 0.0, %v1491
      %v1493 = vpop.f32.mrf.mxu0
      %v1494 = vadd.f32 0.0, %v1493
      %1495 = vdwg.mxu0
      %1496 = vmatpush.bf16.msra.mxu0 0
      %1497 = vmatpush.bf16.msra.mxu0 0
      %1498 = vmatpush.bf16.msra.mxu0 0
      %1499 = vmatpush.bf16.msra.mxu0 0
      %1500 = vmatpush.bf16.msra.mxu0 0
      %1501 = vmatpush.bf16.msra.mxu0 0
      %1502 = vmatpush.bf16.msra.mxu0 0
      %1503 = vmatpush.bf16.msra.mxu0 %v1475
      %1504 = vmatmul.bf16.gmra.mxu0 %v1480
      %v1505 = vpop.f32.mrf.mxu0
      %v1506 = vadd.f32 0.0, %v1505
      %v1507 = vpop.f32.mrf.mxu0
      %v1508 = vadd.f32 0.0, %v1507
      %1509 = vdwg.mxu0
      %1510 = vmatpush.bf16.msra.mxu0 0
      %1511 = vmatpush.bf16.msra.mxu0 0
      %1512 = vmatpush.bf16.msra.mxu0 0
      %1513 = vmatpush.bf16.msra.mxu0 0
      %1514 = vmatpush.bf16.msra.mxu0 0
      %1515 = vmatpush.bf16.msra.mxu0 0
      %1516 = vmatpush.bf16.msra.mxu0 0
      %1517 = vmatpush.bf16.msra.mxu0 %v1473
      %1518 = vmatmul.bf16.gmra.mxu0 %v1480
      %v1519 = vpop.f32.mrf.mxu0
      %v1520 = vadd.f32 0.0, %v1519
      %v1521 = vpop.f32.mrf.mxu0
      %v1522 = vadd.f32 0.0, %v1521
      %1523 = vdwg.mxu0
      %v1524 = vadd.f32 %v1454, %v1492
      %v1525 = vadd.f32 %v1455, %v1506
      %v1526 = vadd.f32 %v1456, %v1520
      %v1527 = vadd.f32 %v1457, %v1494
      %v1528 = vadd.f32 %v1458, %v1508
      %v1529 = vadd.f32 %v1459, %v1522
      %s1530 = scalar_lea.vmem %s3, 56
      %v1531 = vld [vmem:[%s1530] sm:$0xf]
      %v1532 = vld [vmem:[%s1530 + $0x4] sm:$0xf]
      %v1535 = vunpack.c.l.b16 %v1531
      %v1536 = vunpack.c.l.b16 %v1532
      %v1537 = vpack.c.b16 %v1536, %v1535
      %1538 = vrot.lane.b32.xlu0 %v1068, 91
      %v1539 = vpop.permute.xlu0 %1538
      %1540 = vrot.lane.b32.xlu0 %v1069, 91
      %v1541 = vpop.permute.xlu0 %1540
      %1542 = vrot.lane.b32.xlu0 %v1070, 91
      %v1543 = vpop.permute.xlu0 %1542
      %v1544 = vsel %vm840, %v1539, %v1541
      %v1545 = vsel %vm840, %v1541, %v1543
      %v1550 = vsel %vm372, %v1537, 0
      %1552 = vmatpush.bf16.msra.mxu0 0
      %1553 = vmatpush.bf16.msra.mxu0 0
      %1554 = vmatpush.bf16.msra.mxu0 0
      %1555 = vmatpush.bf16.msra.mxu0 0
      %1556 = vmatpush.bf16.msra.mxu0 0
      %1557 = vmatpush.bf16.msra.mxu0 0
      %1558 = vmatpush.bf16.msra.mxu0 0
      %1559 = vmatpush.bf16.msra.mxu0 %v1544
      %1560 = vmatmul.bf16.gmra.mxu0 %v1550
      %v1561 = vpop.f32.mrf.mxu0
      %v1562 = vadd.f32 0.0, %v1561
      %v1563 = vpop.f32.mrf.mxu0
      %v1564 = vadd.f32 0.0, %v1563
      %1565 = vdwg.mxu0
      %1566 = vmatpush.bf16.msra.mxu0 0
      %1567 = vmatpush.bf16.msra.mxu0 0
      %1568 = vmatpush.bf16.msra.mxu0 0
      %1569 = vmatpush.bf16.msra.mxu0 0
      %1570 = vmatpush.bf16.msra.mxu0 0
      %1571 = vmatpush.bf16.msra.mxu0 0
      %1572 = vmatpush.bf16.msra.mxu0 0
      %1573 = vmatpush.bf16.msra.mxu0 %v1545
      %1574 = vmatmul.bf16.gmra.mxu0 %v1550
      %v1575 = vpop.f32.mrf.mxu0
      %v1576 = vadd.f32 0.0, %v1575
      %v1577 = vpop.f32.mrf.mxu0
      %v1578 = vadd.f32 0.0, %v1577
      %1579 = vdwg.mxu0
      %1580 = vmatpush.bf16.msra.mxu0 0
      %1581 = vmatpush.bf16.msra.mxu0 0
      %1582 = vmatpush.bf16.msra.mxu0 0
      %1583 = vmatpush.bf16.msra.mxu0 0
      %1584 = vmatpush.bf16.msra.mxu0 0
      %1585 = vmatpush.bf16.msra.mxu0 0
      %1586 = vmatpush.bf16.msra.mxu0 0
      %1587 = vmatpush.bf16.msra.mxu0 %v1543
      %1588 = vmatmul.bf16.gmra.mxu0 %v1550
      %v1589 = vpop.f32.mrf.mxu0
      %v1590 = vadd.f32 0.0, %v1589
      %v1591 = vpop.f32.mrf.mxu0
      %v1592 = vadd.f32 0.0, %v1591
      %1593 = vdwg.mxu0
      %v1594 = vadd.f32 %v1524, %v1562
      %v1595 = vadd.f32 %v1525, %v1576
      %v1596 = vadd.f32 %v1526, %v1590
      %v1597 = vadd.f32 %v1527, %v1564
      %v1598 = vadd.f32 %v1528, %v1578
      %v1599 = vadd.f32 %v1529, %v1592
      %s1600 = scalar_lea.vmem %s3, 64
      %v1601 = vld [vmem:[%s1600] sm:$0xf]
      %v1602 = vld [vmem:[%s1600 + $0x4] sm:$0xf]
      %v1605 = vunpack.c.l.b16 %v1601
      %v1606 = vunpack.c.l.b16 %v1602
      %v1607 = vpack.c.b16 %v1606, %v1605
      %1608 = vrot.lane.b32.xlu0 %v1068, 90
      %v1609 = vpop.permute.xlu0 %1608
      %1610 = vrot.lane.b32.xlu0 %v1069, 90
      %v1611 = vpop.permute.xlu0 %1610
      %1612 = vrot.lane.b32.xlu0 %v1070, 90
      %v1613 = vpop.permute.xlu0 %1612
      %v1614 = vsel %vm911, %v1609, %v1611
      %v1615 = vsel %vm911, %v1611, %v1613
      %v1620 = vsel %vm372, %v1607, 0
      %1622 = vmatpush.bf16.msra.mxu0 0
      %1623 = vmatpush.bf16.msra.mxu0 0
      %1624 = vmatpush.bf16.msra.mxu0 0
      %1625 = vmatpush.bf16.msra.mxu0 0
      %1626 = vmatpush.bf16.msra.mxu0 0
      %1627 = vmatpush.bf16.msra.mxu0 0
      %1628 = vmatpush.bf16.msra.mxu0 0
      %1629 = vmatpush.bf16.msra.mxu0 %v1614
      %1630 = vmatmul.bf16.gmra.mxu0 %v1620
      %v1631 = vpop.f32.mrf.mxu0
      %v1632 = vadd.f32 0.0, %v1631
      %v1633 = vpop.f32.mrf.mxu0
      %v1634 = vadd.f32 0.0, %v1633
      %1635 = vdwg.mxu0
      %1636 = vmatpush.bf16.msra.mxu0 0
      %1637 = vmatpush.bf16.msra.mxu0 0
      %1638 = vmatpush.bf16.msra.mxu0 0
      %1639 = vmatpush.bf16.msra.mxu0 0
      %1640 = vmatpush.bf16.msra.mxu0 0
      %1641 = vmatpush.bf16.msra.mxu0 0
      %1642 = vmatpush.bf16.msra.mxu0 0
      %1643 = vmatpush.bf16.msra.mxu0 %v1615
      %1644 = vmatmul.bf16.gmra.mxu0 %v1620
      %v1645 = vpop.f32.mrf.mxu0
      %v1646 = vadd.f32 0.0, %v1645
      %v1647 = vpop.f32.mrf.mxu0
      %v1648 = vadd.f32 0.0, %v1647
      %1649 = vdwg.mxu0
      %1650 = vmatpush.bf16.msra.mxu0 0
      %1651 = vmatpush.bf16.msra.mxu0 0
      %1652 = vmatpush.bf16.msra.mxu0 0
      %1653 = vmatpush.bf16.msra.mxu0 0
      %1654 = vmatpush.bf16.msra.mxu0 0
      %1655 = vmatpush.bf16.msra.mxu0 0
      %1656 = vmatpush.bf16.msra.mxu0 0
      %1657 = vmatpush.bf16.msra.mxu0 %v1613
      %1658 = vmatmul.bf16.gmra.mxu0 %v1620
      %v1659 = vpop.f32.mrf.mxu0
      %v1660 = vadd.f32 0.0, %v1659
      %v1661 = vpop.f32.mrf.mxu0
      %v1662 = vadd.f32 0.0, %v1661
      %1663 = vdwg.mxu0
      %v1664 = vadd.f32 %v1594, %v1632
      %v1665 = vadd.f32 %v1595, %v1646
      %v1666 = vadd.f32 %v1596, %v1660
      %v1667 = vadd.f32 %v1597, %v1634
      %v1668 = vadd.f32 %v1598, %v1648
      %v1669 = vadd.f32 %v1599, %v1662
      %v1670 = vld [vmem:[%s4] sm:$0xff]
      %v1671 = vld [vmem:[%s4 + $0x8] sm:$0xff]
      %1673 = vset.pattern.permute.xlu0 0
      %1674 = vperm.xlu0 %1673, %v1670
      %v1675 = vpop.permute.xlu0 %1674
      %1678 = vset.pattern.permute.xlu0 0
      %1679 = vperm.xlu0 %1678, %v1671
      %v1680 = vpop.permute.xlu0 %1679
      %v1682 = vadd.f32 %v1664, %v1675
      %v1683 = vadd.f32 %v1665, %v1675
      %v1684 = vadd.f32 %v1666, %v1675
      %v1685 = vadd.f32 %v1667, %v1680
      %v1686 = vadd.f32 %v1668, %v1680
      %v1687 = vadd.f32 %v1669, %v1680
      %v1688 = vmax.f32 %v1682, 0.0
      %v1689 = vmax.f32 %v1683, 0.0
      %v1690 = vmax.f32 %v1684, 0.0
      %v1691 = vmax.f32 %v1685, 0.0
      %v1692 = vmax.f32 %v1686, 0.0
      %v1693 = vmax.f32 %v1687, 0.0
      %v1694 = vmul.f32 %v1688, %v993
      %v1695 = vmul.f32 %v1689, %v994
      %v1696 = vmul.f32 %v1690, %v995
      %v1697 = vmul.f32 %v1691, %v993
      %v1698 = vmul.f32 %v1692, %v994
      %v1699 = vmul.f32 %v1693, %v995
      %v1700 = vpack.c.bf16 %v1695, %v1694
      %v1701 = vpack.c.bf16 %v1696, %v1696
      %v1702 = vpack.c.bf16 %v1698, %v1697
      %v1703 = vpack.c.bf16 %v1699, %v1699
      %v1704 = vunpack.c.l.bf16 %v1700
      %v1705 = vunpack.c.h.bf16 %v1700
      %v1706 = vunpack.c.l.bf16 %v1701
      %v1707 = vunpack.c.l.bf16 %v1702
      %v1708 = vunpack.c.h.bf16 %v1702
      %v1709 = vunpack.c.l.bf16 %v1703
      %1710 = vst [vmem:[%s320] sm:$0xff] %v1700
      %vm1711 = vcmask 257024
      %1712 = vst.msk [vmem:[%s320 + $0x8] sm:$0xf] %vm1711, %v1701
      %1713 = vst [vmem:[%s320 + $0xc] sm:$0xff] %v1702
      %1714 = vst.msk [vmem:[%s320 + $0x14] sm:$0xf] %vm1711, %v1703
      %v1715 = vadd.f32 %v1704, %v1705
      %vm1716 = vcmask 261120
      %v1717 = vsel %vm1716, %v1706, 0.0
      %v1718 = vadd.f32 %v1715, %v1717
      %1719 = vadd.xlane.f32.xlu0 %v1718
      %v1720 = vpop.xlane.xlu0 %1719
      %v1721 = vadd.f32 %v1707, %v1708
      %v1722 = vsel %vm1716, %v1709, 0.0
      %v1723 = vadd.f32 %v1721, %v1722
      %1724 = vadd.xlane.f32.xlu0 %v1723
      %v1725 = vpop.xlane.xlu0 %1724
      %vm1726 = vcmask 7168
      %1727 = vst.msk [vmem:[%s325] sm:$0xff] %vm1726, %v1720
      %1728 = vst.msk [vmem:[%s325 + $0x8] sm:$0xff] %vm1726, %v1725
      %v1729 = vmul.f32 %v1704, %v1704
      %v1730 = vmul.f32 %v1705, %v1705
      %v1731 = vmul.f32 %v1706, %v1706
      %v1732 = vmul.f32 %v1707, %v1707
      %v1733 = vmul.f32 %v1708, %v1708
      %v1734 = vmul.f32 %v1709, %v1709
      %v1735 = vadd.f32 %v1729, %v1730
      %v1736 = vsel %vm1716, %v1731, 0.0
      %v1737 = vadd.f32 %v1735, %v1736
      %1738 = vadd.xlane.f32.xlu0 %v1737
      %v1739 = vpop.xlane.xlu0 %1738
      %v1740 = vadd.f32 %v1732, %v1733
      %v1741 = vsel %vm1716, %v1734, 0.0
      %v1742 = vadd.f32 %v1740, %v1741
      %1743 = vadd.xlane.f32.xlu0 %v1742
      %v1744 = vpop.xlane.xlu0 %1743
      %1745 = vst.msk [vmem:[%s330] sm:$0xff] %vm1726, %v1739
      %1746 = vst.msk [vmem:[%s330 + $0x8] sm:$0xff] %vm1726, %v1744
      %p1747 = scmp.lt.s32.totalorder %s20, 1
      %s1748 = scalar_select %p1747, %s20, 1
      %s1749 = smul.addr %s1748, 6
      %s1750 = smul.addr %s1749, 4
      %s1751 = scalar_lea.vmem %s6, %s1750
      %p1752 = scmp.lt.s32.totalorder %s20, 1
      %s1753 = scalar_select %p1752, %s20, 1
      %s1754 = smul.addr %s1753, 2
      %s1755 = smul.addr %s1754, 8
      %s1756 = scalar_lea.vmem %s7, %s1755
      %p1757 = scmp.lt.s32.totalorder %s20, 1
      %s1758 = scalar_select %p1757, %s20, 1
      %s1759 = smul.addr %s1758, 2
      %s1760 = smul.addr %s1759, 8
      %s1761 = scalar_lea.vmem %s8, %s1760
      // Predicated region
      $region45: #{residual_block_forward.1} parent=43 // pred_check
        %p1762 = pneg %p169
      $region46: #{residual_block_forward.1} parent=43 // pred_check_branch
        %1764 = sbr.rel (%p1762) target = $region48
      $region47: #{residual_block_forward.1} parent=43 // pred_region
        _
      $region48: #{residual_block_forward.1} parent=43 // pred_fallthru
        _
      // Predicated region
      $region49: #{residual_block_forward.1} parent=43 // pred_check
        %p1765 = pneg %p195
      $region50: #{residual_block_forward.1} parent=43 // pred_check_branch
        %1767 = sbr.rel (%p1765) target = $region52
      $region51: #{residual_block_forward.1} parent=43 // pred_region
        _
      $region52: #{residual_block_forward.1} parent=43 // pred_fallthru
        _
      // Predicated region
      $region53: #{residual_block_forward.1} parent=43 // pred_check
        %p1768 = pneg %p221
      $region54: #{residual_block_forward.1} parent=43 // pred_check_branch
        %1770 = sbr.rel (%p1768) target = $region56
      $region55: #{residual_block_forward.1} parent=43 // pred_region
        _
      $region56: #{residual_block_forward.1} parent=43 // pred_fallthru
        _
    $region44: #{residual_block_forward.1} parent=5 // pred_fallthru
      _
    %p1771 = scmp.le.s32.totalorder 2, %s15
    // Predicated region
    $region57: #{residual_block_forward.1} parent=5 // pred_check
      %p1772 = pneg %p1771
    $region58: #{residual_block_forward.1} parent=5 // pred_check_branch
      %1774 = sbr.rel (%p1772) target = $region60
    $region59: #{residual_block_forward.1} parent=5 // pred_region
      %s1775 = ssub.s32 %s15, 2
      // Predicated region
      $region61: #{residual_block_forward.1} parent=59 // pred_check
        %p1776 = pneg %p175
      $region62: #{residual_block_forward.1} parent=59 // pred_check_branch
        %1778 = sbr.rel (%p1776) target = $region64
      $region63: #{residual_block_forward.1} parent=59 // pred_region
        %p1779 = scmp.lt.s32.totalorder %s21, 1
        %s1780 = scalar_select %p1779, %s21, 1
        %s1781 = smul.addr %s1780, 6
        %s1782 = smul.addr %s1781, 4
        %s1783 = scalar_lea.vmem %s6, %s1782
      $region64: #{residual_block_forward.1} parent=59 // pred_fallthru
        _
      // Predicated region
      $region65: #{residual_block_forward.1} parent=59 // pred_check
        %p1784 = pneg %p201
      $region66: #{residual_block_forward.1} parent=59 // pred_check_branch
        %1786 = sbr.rel (%p1784) target = $region68
      $region67: #{residual_block_forward.1} parent=59 // pred_region
        %p1787 = scmp.lt.s32.totalorder %s21, 1
        %s1788 = scalar_select %p1787, %s21, 1
        %s1789 = smul.addr %s1788, 2
        %s1790 = smul.addr %s1789, 8
        %s1791 = scalar_lea.vmem %s7, %s1790
      $region68: #{residual_block_forward.1} parent=59 // pred_fallthru
        _
      // Predicated region
      $region69: #{residual_block_forward.1} parent=59 // pred_check
        %p1792 = pneg %p227
      $region70: #{residual_block_forward.1} parent=59 // pred_check_branch
        %1794 = sbr.rel (%p1792) target = $region72
      $region71: #{residual_block_forward.1} parent=59 // pred_region
        %p1795 = scmp.lt.s32.totalorder %s21, 1
        %s1796 = scalar_select %p1795, %s21, 1
        %s1797 = smul.addr %s1796, 2
        %s1798 = smul.addr %s1797, 8
        %s1799 = scalar_lea.vmem %s8, %s1798
      $region72: #{residual_block_forward.1} parent=59 // pred_fallthru
        _
    $region60: #{residual_block_forward.1} parent=5 // pred_fallthru
      _
  $region6: #{residual_block_forward.1} parent=0 // loop_footer
    %s19 = sadd.s32 1, %s15
  $region7: #{residual_block_forward.1} parent=0 // loop_footer_branch
    %14 = sbr.rel target = $region3
  $region8: #{residual_block_forward.1} parent=0 // loop_exit
    _

</llo_original>
